<compile_context>
chip_gen: v6e
topology: v6e:2x2x1
jax: 0.10.0
libtpu: 0.0.40
codegen_flags: <defaults>
</compile_context>

<pallas_src>
import functools

import jax
import jax.numpy as jnp
import numpy as np
from jax.experimental import pallas as pl
from jax.experimental.pallas import tpu as pltpu


# ----------------------------------------------------------------------------- #
# Generation-aware budgets                                                        #
# ----------------------------------------------------------------------------- #
def _vmem_capacity_bytes():
    try:
        return int(pltpu.get_tpu_info().vmem_capacity_bytes)
    except Exception:
        return 64 << 20  # conservative fallback (v7x per-TensorCore)


def _vmem_limit_bytes(per_step_bytes, capacity):
    # double-buffered pipeline per step + headroom, clamped to 75% of physical VMEM.
    need = 2 * per_step_bytes + (4 << 20)
    cap = int(0.75 * capacity)
    return int(min(max(need, 16 << 20), cap))


def _pick_l_tile(l_pad, channels, itemsize, capacity):
    """Largest lane-dense tile dividing the (padded) L that fits the byte budget."""
    budget = max(capacity // 16, 2 << 20)  # ~8 MiB on 128 MiB parts, ~4 MiB on v7x
    for cand in (8192, 4096, 2048, 1024, 512, 256, 128):
        if l_pad % cand == 0 and channels * cand * itemsize <= budget:
            return cand
    return 128


# ----------------------------------------------------------------------------- #
# Shared bottleneck-MLP body (runs on a (1, C) context row, all f32)              #
# ----------------------------------------------------------------------------- #
def _bottleneck_mlp(ctx_row, w1, b1, gamma, beta, w2, b2, *, eps, apply_sigmoid):
    h = jnp.dot(ctx_row, w1, preferred_element_type=jnp.float32) + b1      # (1, Cr)
    mu = jnp.mean(h, axis=1, keepdims=True)
    var = jnp.mean(jnp.square(h - mu), axis=1, keepdims=True)
    h = (h - mu) * jax.lax.rsqrt(var + eps)
    h = h * gamma + beta
    h = jnp.maximum(h, 0.0)                                                 # ReLU
    h = jnp.dot(h, w2, preferred_element_type=jnp.float32) + b2             # (1, C)
    if apply_sigmoid:                                                       # mode == 'mul'
        h = jax.nn.sigmoid(h)
    return h


# ----------------------------------------------------------------------------- #
# Kernel A (tiled path): online-softmax context over L + fused bottleneck MLP     #
# ----------------------------------------------------------------------------- #
def _context_mlp_kernel(x_ref, wmask_ref, w1_ref, b1_ref, gamma_ref, beta_ref,
                        w2_ref, b2_ref, att_ref, m_scr, s_scr, acc_scr,
                        *, eps, apply_sigmoid, length, l_tile, needs_mask):
    t = pl.program_id(1)

    @pl.when(t == 0)
    def _init():
        m_scr[...] = jnp.full_like(m_scr, -jnp.inf)
        s_scr[...] = jnp.zeros_like(s_scr)
        acc_scr[...] = jnp.zeros_like(acc_scr)

    x = x_ref[0].astype(jnp.float32)                  # (C, Lt)
    w = wmask_ref[...]                                # (C, 1) f32, VMEM-resident

    # Conv1d(C -> 1, k=1): per-position channel dot on VPU + sublane reduce.
    # Scalar mask bias omitted: softmax over L is shift-invariant.
    logits = jnp.sum(x * w, axis=0, keepdims=True)    # (1, Lt) f32
    if needs_mask:
        lane = jax.lax.broadcasted_iota(jnp.int32, logits.shape, 1) + t * l_tile
        logits = jnp.where(lane < length, logits, -jnp.inf)

    # Online softmax update (f32).
    m_prev = m_scr[...]                                               # (1, 1)
    m_new = jnp.maximum(m_prev, jnp.max(logits, axis=1, keepdims=True))
    alpha = jnp.exp(m_prev - m_new)                                   # (1, 1)
    p = jnp.exp(logits - m_new)                                       # (1, Lt)

    s_scr[...] = alpha * s_scr[...] + jnp.sum(p, axis=1, keepdims=True)
    acc_scr[...] = alpha * acc_scr[...] + jnp.sum(x * p, axis=1, keepdims=True)
    m_scr[...] = m_new

    @pl.when(t == pl.num_programs(1) - 1)
    def _finalize():
        inv = pl.reciprocal(s_scr[...], approx=False)                 # (1, 1)
        ctx_row = jnp.transpose(acc_scr[...] * inv)                   # (C,1) -> (1,C)
        h = _bottleneck_mlp(ctx_row, w1_ref[...], b1_ref[...], gamma_ref[...],
                            beta_ref[...], w2_ref[...], b2_ref[...],
                            eps=eps, apply_sigmoid=apply_sigmoid)     # (1, C)
        # Emit the gate as a (C, 1) column: one transpose per batch, none per L-tile.
        att_ref[0] = jnp.transpose(h)


# ----------------------------------------------------------------------------- #
# Kernel B (tiled path): streaming gating sweep over L                            #
# ----------------------------------------------------------------------------- #
def _gating_kernel(x_ref, att_ref, out_ref, *, multiply):
    gate = att_ref[0]                                 # (C, 1) f32, sublane broadcast
    x = x_ref[0].astype(jnp.float32)                  # (C, Lt)
    y = x * gate if multiply else x + gate
    out_ref[0] = y.astype(out_ref.dtype)


# ----------------------------------------------------------------------------- #
# Fully fused kernel: whole (C, L) slab per batch resident in VMEM                #
# ----------------------------------------------------------------------------- #
def _fused_kernel(x_ref, wmask_ref, w1_ref, b1_ref, gamma_ref, beta_ref,
                  w2_ref, b2_ref, out_ref, *, eps, multiply):
    x = x_ref[0].astype(jnp.float32)                  # (C, L)
    w = wmask_ref[...]                                # (C, 1)

    logits = jnp.sum(x * w, axis=0, keepdims=True)    # (1, L)
    m = jnp.max(logits, axis=1, keepdims=True)
    p = jnp.exp(logits - m)
    inv = pl.reciprocal(jnp.sum(p, axis=1, keepdims=True), approx=False)
    ctx_row = jnp.transpose(jnp.sum(x * p, axis=1, keepdims=True) * inv)   # (1, C)

    h = _bottleneck_mlp(ctx_row, w1_ref[...], b1_ref[...], gamma_ref[...],
                        beta_ref[...], w2_ref[...], b2_ref[...],
                        eps=eps, apply_sigmoid=multiply)                   # (1, C)
    gate = jnp.transpose(h)                                                # (C, 1)

    y = x * gate if multiply else x + gate
    out_ref[0] = y.astype(out_ref.dtype)


# ----------------------------------------------------------------------------- #
# Wrapper                                                                        #
# ----------------------------------------------------------------------------- #
def gc_module_forward(x, params, *, reduction=16, mode="mul", l_tile=None,
                      ln_eps=1e-5, fuse=None):
    """Pallas-TPU forward pass of GCModule.

    x: (N, C, L).  params holds PyTorch-shaped tensors:
      conv_mask_w (1,C,1), conv_mask_b (1,), att_conv1_w (C//r,C,1), att_conv1_b (C//r,),
      ln_w (C//r,1), ln_b (C//r,1), att_conv2_w (C,C//r,1), att_conv2_b (C,).
    fuse: None = auto (fused single kernel when the per-batch slab fits VMEM),
          True/False = force.
    """
    if mode not in ("mul", "add"):
        raise ValueError(f"unsupported mode: {mode}")
    n, c, length = x.shape
    assert c % reduction == 0, "channels must be divisible by reduction"
    cr = c // reduction
    multiply = (mode == "mul")

    # Repack weights: mask weight as a (C, 1) column; MLP weights transposed for
    # row-major (1, C) @ (C, Cr) / (1, Cr) @ (Cr, C) matmuls; biases / LN params as rows.
    w_mask = jnp.asarray(params["conv_mask_w"], jnp.float32).reshape(c, 1)
    w1 = jnp.asarray(params["att_conv1_w"], jnp.float32).reshape(cr, c).T    # (C, Cr)
    b1 = jnp.asarray(params["att_conv1_b"], jnp.float32).reshape(1, cr)
    gamma = jnp.asarray(params["ln_w"], jnp.float32).reshape(1, cr)
    beta = jnp.asarray(params["ln_b"], jnp.float32).reshape(1, cr)
    w2 = jnp.asarray(params["att_conv2_w"], jnp.float32).reshape(c, cr).T    # (Cr, C)
    b2 = jnp.asarray(params["att_conv2_b"], jnp.float32).reshape(1, c)
    # NOTE: params["conv_mask_b"] is intentionally unused — a constant bias on the
    # 1-channel mask logits cancels under the softmax over L.
    weights = (w_mask, w1, b1, gamma, beta, w2, b2)
    weight_bytes = sum(int(np.prod(w.shape)) * 4 for w in weights)

    capacity = _vmem_capacity_bytes()
    itemsize = x.dtype.itemsize

    # ---- Fully fused path (2*|x| HBM traffic, one launch). -----------------------
    slab_in = c * length * itemsize
    slab_f32 = c * length * 4
    fused_need = 4 * slab_in + 3 * slab_f32 + 2 * weight_bytes + (2 << 20)
    use_fused = (fused_need <= int(0.7 * capacity)) if fuse is None else bool(fuse)

    if use_fused:
        return pl.pallas_call(
            functools.partial(_fused_kernel, eps=ln_eps, multiply=multiply),
            grid=(n,),
            in_specs=[pl.BlockSpec((1, c, length), lambda i: (i, 0, 0))]
            + [pl.BlockSpec(w.shape, lambda i: (0, 0)) for w in weights],
            out_specs=pl.BlockSpec((1, c, length), lambda i: (i, 0, 0)),
            out_shape=jax.ShapeDtypeStruct((n, c, length), x.dtype),
            compiler_params=pltpu.CompilerParams(
                dimension_semantics=("parallel",),
                vmem_limit_bytes=int(min(max(fused_need, 32 << 20), int(0.8 * capacity))),
            ),
        )(x, *weights)

    # ---- Tiled two-pass path. -----------------------------------------------------
    # Pad L to a multiple of 128 so every block is lane-dense; padded lanes are
    # masked to -inf in the softmax and the output is sliced back at the end.
    l_pad = ((length + 127) // 128) * 128
    x_in = x if l_pad == length else jnp.pad(x, ((0, 0), (0, 0), (0, l_pad - length)))

    if l_tile is None:
        l_tile = _pick_l_tile(l_pad, c, itemsize, capacity)
    assert l_pad % l_tile == 0 and l_tile % 128 == 0, \
        "l_tile must divide the padded L and be a multiple of 128"
    num_lt = l_pad // l_tile
    needs_mask = (l_pad != length)

    x_tile_bytes = c * l_tile * itemsize
    x_tile_f32 = c * l_tile * 4

    # Pass 1: online-softmax context over L tiles, bottleneck MLP fused into the
    # finalize branch (all weights VMEM-resident via constant index_maps).
    att = pl.pallas_call(
        functools.partial(_context_mlp_kernel, eps=ln_eps, apply_sigmoid=multiply,
                          length=length, l_tile=l_tile, needs_mask=needs_mask),
        grid=(n, num_lt),
        in_specs=[pl.BlockSpec((1, c, l_tile), lambda i, t: (i, 0, t))]
        + [pl.BlockSpec(w.shape, lambda i, t: (0, 0)) for w in weights],
        out_specs=pl.BlockSpec((1, c, 1), lambda i, t: (i, 0, 0)),
        out_shape=jax.ShapeDtypeStruct((n, c, 1), jnp.float32),
        scratch_shapes=[
            pltpu.VMEM((1, 1), jnp.float32),   # running max
            pltpu.VMEM((1, 1), jnp.float32),   # running softmax denominator
            pltpu.VMEM((c, 1), jnp.float32),   # running weighted context (f32)
        ],
        compiler_params=pltpu.CompilerParams(
            dimension_semantics=("parallel", "arbitrary"),
            vmem_limit_bytes=_vmem_limit_bytes(
                x_tile_bytes + x_tile_f32 + 2 * weight_bytes, capacity),
        ),
    )(x_in, *weights)

    # Pass 2: gating sweep over L (fully parallel grid, lane-dense stores, no
    # per-step gate transpose).
    out_pad = pl.pallas_call(
        functools.partial(_gating_kernel, multiply=multiply),
        grid=(n, num_lt),
        in_specs=[
            pl.BlockSpec((1, c, l_tile), lambda i, t: (i, 0, t)),
            pl.BlockSpec((1, c, 1), lambda i, t: (i, 0, 0)),
        ],
        out_specs=pl.BlockSpec((1, c, l_tile), lambda i, t: (i, 0, t)),
        out_shape=jax.ShapeDtypeStruct((n, c, l_pad), x.dtype),
        compiler_params=pltpu.CompilerParams(
            dimension_semantics=("parallel", "parallel"),
            vmem_limit_bytes=_vmem_limit_bytes(2 * x_tile_bytes + 2 * x_tile_f32, capacity),
        ),
    )(x_in, att)

    return out_pad if l_pad == length else out_pad[:, :, :length]


# ----------------------------------------------------------------------------- #
# Pure-JAX reference (mirrors the PyTorch module exactly, incl. mask bias)       #
# ----------------------------------------------------------------------------- #
def _reference_forward(x, params, *, reduction=16, mode="mul", ln_eps=1e-5):
    hp = jax.lax.Precision.HIGHEST
    n, c, length = x.shape
    cr = c // reduction
    xf = x.astype(jnp.float32)

    wm = params["conv_mask_w"].reshape(1, c)
    logits = jnp.einsum("oc,ncl->nol", wm, xf, precision=hp)
    logits = logits + params["conv_mask_b"].reshape(1, 1, 1)
    p = jax.nn.softmax(logits, axis=2)[:, 0, :]                       # (N, L)
    ctx = jnp.einsum("ncl,nl->nc", xf, p, precision=hp)               # (N, C)

    w1 = params["att_conv1_w"].reshape(cr, c)
    h = jnp.einsum("nc,oc->no", ctx, w1, precision=hp) + params["att_conv1_b"][None, :]
    mu = h.mean(axis=1, keepdims=True)
    var = ((h - mu) ** 2).mean(axis=1, keepdims=True)
    h = (h - mu) / jnp.sqrt(var + ln_eps)
    h = h * params["ln_w"].reshape(1, cr) + params["ln_b"].reshape(1, cr)
    h = jnp.maximum(h, 0.0)
    w2 = params["att_conv2_w"].reshape(c, cr)
    h = jnp.einsum("nr,or->no", h, w2, precision=hp) + params["att_conv2_b"][None, :]

    if mode == "mul":
        return (xf * jax.nn.sigmoid(h)[:, :, None]).astype(x.dtype)
    return (xf + h[:, :, None]).astype(x.dtype)


if __name__ == "__main__":
    # Make in-kernel and reference f32 matmuls use the same (highest) precision so
    # the numerical comparison is tight.
    jax.config.update("jax_default_matmul_precision", "highest")

    def make_params(key, c, cr):
        ks = jax.random.split(key, 8)
        return {
            "conv_mask_w": 0.05 * jax.random.normal(ks[0], (1, c, 1), jnp.float32),
            "conv_mask_b": 0.05 * jax.random.normal(ks[1], (1,), jnp.float32),
            "att_conv1_w": 0.05 * jax.random.normal(ks[2], (cr, c, 1), jnp.float32),
            "att_conv1_b": 0.05 * jax.random.normal(ks[3], (cr,), jnp.float32),
            "ln_w": 1.0 + 0.1 * jax.random.normal(ks[4], (cr, 1), jnp.float32),
            "ln_b": 0.1 * jax.random.normal(ks[5], (cr, 1), jnp.float32),
            "att_conv2_w": 0.05 * jax.random.normal(ks[6], (c, cr, 1), jnp.float32),
            "att_conv2_b": 0.05 * jax.random.normal(ks[7], (c,), jnp.float32),
        }

    root = jax.random.PRNGKey(0)
    k1, k2, k3, k4 = jax.random.split(root, 4)

    # Case 1: fully fused single-kernel path (slab fits VMEM), mode='mul'.
    n, c, length, r = 2, 128, 1024, 16
    x = jax.random.normal(k1, (n, c, length), jnp.float32)
    params = make_params(k2, c, c // r)
    ref = jax.block_until_ready(_reference_forward(x, params, reduction=r, mode="mul"))
    out = jax.block_until_ready(gc_module_forward(x, params, reduction=r, mode="mul"))
    np.testing.assert_allclose(np.asarray(out), np.asarray(ref), rtol=5e-3, atol=5e-3)

    # Case 2: forced tiled two-pass path — exercises the online-softmax accumulation
    # across 4 L-tiles and the standalone gating sweep.
    out = jax.block_until_ready(
        gc_module_forward(x, params, reduction=r, mode="mul", fuse=False, l_tile=256))
    np.testing.assert_allclose(np.asarray(out), np.asarray(ref), rtol=5e-3, atol=5e-3)

    # Case 3: tiled path with a non-128-aligned L (padding + masked softmax), mode='add'.
    n, c, length, r = 2, 64, 600, 16
    x = jax.random.normal(k3, (n, c, length), jnp.float32)
    params = make_params(k4, c, c // r)
    ref = jax.block_until_ready(_reference_forward(x, params, reduction=r, mode="add"))
    out = jax.block_until_ready(
        gc_module_forward(x, params, reduction=r, mode="add", fuse=False))
    np.testing.assert_allclose(np.asarray(out), np.asarray(ref), rtol=5e-3, atol=5e-3)

    print("KERNEL_OK")
</pallas_src>

<mosaic_0001>
module attributes {stable_mosaic.version = 11 : i64} {
  func.func @_fused_kernel(%arg0: i32, %arg1: memref<1x128x1024xf32, #tpu.memory_space<vmem>>, %arg2: memref<128x1xf32, #tpu.memory_space<vmem>>, %arg3: memref<128x8xf32, #tpu.memory_space<vmem>>, %arg4: memref<1x8xf32, #tpu.memory_space<vmem>>, %arg5: memref<1x8xf32, #tpu.memory_space<vmem>>, %arg6: memref<1x8xf32, #tpu.memory_space<vmem>>, %arg7: memref<8x128xf32, #tpu.memory_space<vmem>>, %arg8: memref<1x128xf32, #tpu.memory_space<vmem>>, %arg9: memref<1x128x1024xf32, #tpu.memory_space<vmem>>) attributes {dimension_semantics = [#tpu.dimension_semantics<parallel>], iteration_bounds = array<i64: 2>, scalar_prefetch = 0 : i64, scratch_operands = 0 : i64, tpu.core_type = #tpu.core_type<tc>, window_params = [{transform_indices = @transform_0, window_bounds = array<i64: 1, 128, 1024>}, {pipeline_mode = #tpu.pipeline_mode<synchronous>, transform_indices = @transform_1, window_bounds = array<i64: 128, 1>}, {pipeline_mode = #tpu.pipeline_mode<synchronous>, transform_indices = @transform_2, window_bounds = array<i64: 128, 8>}, {pipeline_mode = #tpu.pipeline_mode<synchronous>, transform_indices = @transform_3, window_bounds = array<i64: 1, 8>}, {pipeline_mode = #tpu.pipeline_mode<synchronous>, transform_indices = @transform_4, window_bounds = array<i64: 1, 8>}, {pipeline_mode = #tpu.pipeline_mode<synchronous>, transform_indices = @transform_5, window_bounds = array<i64: 1, 8>}, {pipeline_mode = #tpu.pipeline_mode<synchronous>, transform_indices = @transform_6, window_bounds = array<i64: 8, 128>}, {pipeline_mode = #tpu.pipeline_mode<synchronous>, transform_indices = @transform_7, window_bounds = array<i64: 1, 128>}, {transform_indices = @transform_8, window_bounds = array<i64: 1, 128, 1024>}]} {
    %c0 = arith.constant 0 : index
    %c0_0 = arith.constant 0 : index
    %c0_1 = arith.constant 0 : index
    %0 = vector.load %arg1[%c0, %c0_0, %c0_1] : memref<1x128x1024xf32, #tpu.memory_space<vmem>>, vector<1x128x1024xf32>
    %1 = vector.shape_cast %0 : vector<1x128x1024xf32> to vector<128x1024xf32>
    %c0_2 = arith.constant 0 : index
    %c0_3 = arith.constant 0 : index
    %2 = vector.load %arg2[%c0_2, %c0_3] : memref<128x1xf32, #tpu.memory_space<vmem>>, vector<128x1xf32>
    %3 = vector.broadcast %2 : vector<128x1xf32> to vector<128x1024xf32>
    %4 = arith.mulf %1, %3 : vector<128x1024xf32>
    %cst = arith.constant dense<0.000000e+00> : vector<1024xf32>
    %5 = vector.multi_reduction <add>, %4, %cst [0] : vector<128x1024xf32> to vector<1024xf32>
    %6 = vector.shape_cast %5 : vector<1024xf32> to vector<1x1024xf32>
    %cst_4 = arith.constant dense<0xFF800000> : vector<1xf32>
    %7 = vector.multi_reduction <maximumf>, %6, %cst_4 [1] : vector<1x1024xf32> to vector<1xf32>
    %8 = vector.shape_cast %7 : vector<1xf32> to vector<1x1xf32>
    %9 = vector.broadcast %8 : vector<1x1xf32> to vector<1x1024xf32>
    %10 = arith.subf %6, %9 : vector<1x1024xf32>
    %11 = math.exp %10 : vector<1x1024xf32>
    %cst_5 = arith.constant dense<0.000000e+00> : vector<1xf32>
    %12 = vector.multi_reduction <add>, %11, %cst_5 [1] : vector<1x1024xf32> to vector<1xf32>
    %13 = vector.shape_cast %12 : vector<1xf32> to vector<1x1xf32>
    %14 = tpu.reciprocal %13 : vector<1x1xf32> -> vector<1x1xf32>
    %15 = vector.broadcast %11 : vector<1x1024xf32> to vector<128x1024xf32>
    %16 = arith.mulf %1, %15 : vector<128x1024xf32>
    %cst_6 = arith.constant dense<0.000000e+00> : vector<128xf32>
    %17 = vector.multi_reduction <add>, %16, %cst_6 [1] : vector<128x1024xf32> to vector<128xf32>
    %18 = vector.shape_cast %17 : vector<128xf32> to vector<128x1xf32>
    %19 = vector.broadcast %14 : vector<1x1xf32> to vector<128x1xf32>
    %20 = arith.mulf %18, %19 : vector<128x1xf32>
    %21 = tpu.transpose %20, [1, 0] : vector<128x1xf32> -> vector<1x128xf32>
    %c0_7 = arith.constant 0 : index
    %c0_8 = arith.constant 0 : index
    %22 = vector.load %arg3[%c0_7, %c0_8] : memref<128x8xf32, #tpu.memory_space<vmem>>, vector<128x8xf32>
    %c0_9 = arith.constant 0 : index
    %c0_10 = arith.constant 0 : index
    %23 = vector.load %arg4[%c0_9, %c0_10] : memref<1x8xf32, #tpu.memory_space<vmem>>, vector<1x8xf32>
    %c0_11 = arith.constant 0 : index
    %c0_12 = arith.constant 0 : index
    %24 = vector.load %arg5[%c0_11, %c0_12] : memref<1x8xf32, #tpu.memory_space<vmem>>, vector<1x8xf32>
    %c0_13 = arith.constant 0 : index
    %c0_14 = arith.constant 0 : index
    %25 = vector.load %arg6[%c0_13, %c0_14] : memref<1x8xf32, #tpu.memory_space<vmem>>, vector<1x8xf32>
    %c0_15 = arith.constant 0 : index
    %c0_16 = arith.constant 0 : index
    %26 = vector.load %arg7[%c0_15, %c0_16] : memref<8x128xf32, #tpu.memory_space<vmem>>, vector<8x128xf32>
    %c0_17 = arith.constant 0 : index
    %c0_18 = arith.constant 0 : index
    %27 = vector.load %arg8[%c0_17, %c0_18] : memref<1x128xf32, #tpu.memory_space<vmem>>, vector<1x128xf32>
    %cst_19 = arith.constant dense<0.000000e+00> : vector<1x8xf32>
    %28 = tpu.matmul %21, %22, %cst_19 {dimension_numbers = #tpu.dot_dimension_numbers<[1], [0], [0], [1], [0, 0, 1, 1], [], []>, precision = #tpu.contract_precision<fp32>} : vector<1x128xf32>, vector<128x8xf32>, vector<1x8xf32> -> vector<1x8xf32>
    %29 = arith.addf %28, %23 : vector<1x8xf32>
    %cst_20 = arith.constant dense<0.000000e+00> : vector<1xf32>
    %30 = vector.multi_reduction <add>, %29, %cst_20 [1] : vector<1x8xf32> to vector<1xf32>
    %31 = vector.shape_cast %30 : vector<1xf32> to vector<1x1xf32>
    %cst_21 = arith.constant 8.000000e+00 : f32
    %32 = vector.broadcast %cst_21 : f32 to vector<1x1xf32>
    %33 = arith.divf %31, %32 : vector<1x1xf32>
    %34 = vector.broadcast %33 : vector<1x1xf32> to vector<1x8xf32>
    %35 = arith.subf %29, %34 : vector<1x8xf32>
    %36 = arith.mulf %35, %35 : vector<1x8xf32>
    %cst_22 = arith.constant dense<0.000000e+00> : vector<1xf32>
    %37 = vector.multi_reduction <add>, %36, %cst_22 [1] : vector<1x8xf32> to vector<1xf32>
    %38 = vector.shape_cast %37 : vector<1xf32> to vector<1x1xf32>
    %cst_23 = arith.constant 8.000000e+00 : f32
    %39 = vector.broadcast %cst_23 : f32 to vector<1x1xf32>
    %40 = arith.divf %38, %39 : vector<1x1xf32>
    %41 = vector.broadcast %33 : vector<1x1xf32> to vector<1x8xf32>
    %42 = arith.subf %29, %41 : vector<1x8xf32>
    %cst_24 = arith.constant 9.99999974E-6 : f32
    %43 = vector.broadcast %cst_24 : f32 to vector<1x1xf32>
    %44 = arith.addf %40, %43 : vector<1x1xf32>
    %45 = math.rsqrt %44 : vector<1x1xf32>
    %46 = vector.broadcast %45 : vector<1x1xf32> to vector<1x8xf32>
    %47 = arith.mulf %42, %46 : vector<1x8xf32>
    %48 = arith.mulf %47, %24 : vector<1x8xf32>
    %49 = arith.addf %48, %25 : vector<1x8xf32>
    %cst_25 = arith.constant 0.000000e+00 : f32
    %50 = vector.broadcast %cst_25 : f32 to vector<1x8xf32>
    %51 = arith.maximumf %49, %50 : vector<1x8xf32>
    %cst_26 = arith.constant dense<0.000000e+00> : vector<1x128xf32>
    %52 = tpu.matmul %51, %26, %cst_26 {dimension_numbers = #tpu.dot_dimension_numbers<[1], [0], [0], [1], [0, 0, 1, 1], [], []>, precision = #tpu.contract_precision<fp32>} : vector<1x8xf32>, vector<8x128xf32>, vector<1x128xf32> -> vector<1x128xf32>
    %53 = arith.addf %52, %27 : vector<1x128xf32>
    %54 = arith.negf %53 : vector<1x128xf32>
    %55 = math.exp %54 : vector<1x128xf32>
    %cst_27 = arith.constant 1.000000e+00 : f32
    %56 = vector.broadcast %cst_27 : f32 to vector<1x128xf32>
    %57 = arith.addf %56, %55 : vector<1x128xf32>
    %58 = arith.divf %56, %57 : vector<1x128xf32>
    %59 = tpu.transpose %58, [1, 0] : vector<1x128xf32> -> vector<128x1xf32>
    %60 = vector.broadcast %59 : vector<128x1xf32> to vector<128x1024xf32>
    %61 = arith.mulf %1, %60 : vector<128x1024xf32>
    %c0_28 = arith.constant 0 : index
    %c0_29 = arith.constant 0 : index
    %c0_30 = arith.constant 0 : index
    %62 = vector.load %arg9[%c0_28, %c0_29, %c0_30] : memref<1x128x1024xf32, #tpu.memory_space<vmem>>, vector<1x128x1024xf32>
    %63 = vector.shape_cast %62 : vector<1x128x1024xf32> to vector<128x1024xf32>
    %64 = vector.shape_cast %61 : vector<128x1024xf32> to vector<1x128x1024xf32>
    tpu.vector_store %arg9[%c0_28, %c0_29, %c0_30], %64 {strides = array<i32>} : memref<1x128x1024xf32, #tpu.memory_space<vmem>>, vector<1x128x1024xf32>,
    return
  }
  func.func @transform_0(%arg0: i32) -> (i32, i32, i32) {
    %c0_i32 = arith.constant 0 : i32
    %c0_i32_0 = arith.constant 0 : i32
    %c0_i32_1 = arith.constant 0 : i32
    return %arg0, %c0_i32, %c0_i32_0 : i32, i32, i32
  }
  func.func @transform_1(%arg0: i32) -> (i32, i32) {
    %c0_i32 = arith.constant 0 : i32
    %c0_i32_0 = arith.constant 0 : i32
    %c0_i32_1 = arith.constant 0 : i32
    return %c0_i32, %c0_i32_0 : i32, i32
  }
  func.func @transform_2(%arg0: i32) -> (i32, i32) {
    %c0_i32 = arith.constant 0 : i32
    %c0_i32_0 = arith.constant 0 : i32
    %c0_i32_1 = arith.constant 0 : i32
    return %c0_i32, %c0_i32_0 : i32, i32
  }
  func.func @transform_3(%arg0: i32) -> (i32, i32) {
    %c0_i32 = arith.constant 0 : i32
    %c0_i32_0 = arith.constant 0 : i32
    %c0_i32_1 = arith.constant 0 : i32
    return %c0_i32, %c0_i32_0 : i32, i32
  }
  func.func @transform_4(%arg0: i32) -> (i32, i32) {
    %c0_i32 = arith.constant 0 : i32
    %c0_i32_0 = arith.constant 0 : i32
    %c0_i32_1 = arith.constant 0 : i32
    return %c0_i32, %c0_i32_0 : i32, i32
  }
  func.func @transform_5(%arg0: i32) -> (i32, i32) {
    %c0_i32 = arith.constant 0 : i32
    %c0_i32_0 = arith.constant 0 : i32
    %c0_i32_1 = arith.constant 0 : i32
    return %c0_i32, %c0_i32_0 : i32, i32
  }
  func.func @transform_6(%arg0: i32) -> (i32, i32) {
    %c0_i32 = arith.constant 0 : i32
    %c0_i32_0 = arith.constant 0 : i32
    %c0_i32_1 = arith.constant 0 : i32
    return %c0_i32, %c0_i32_0 : i32, i32
  }
  func.func @transform_7(%arg0: i32) -> (i32, i32) {
    %c0_i32 = arith.constant 0 : i32
    %c0_i32_0 = arith.constant 0 : i32
    %c0_i32_1 = arith.constant 0 : i32
    return %c0_i32, %c0_i32_0 : i32, i32
  }
  func.func @transform_8(%arg0: i32) -> (i32, i32, i32) {
    %c0_i32 = arith.constant 0 : i32
    %c0_i32_0 = arith.constant 0 : i32
    %c0_i32_1 = arith.constant 0 : i32
    return %arg0, %c0_i32, %c0_i32_0 : i32, i32, i32
  }
}

</mosaic_0001>

<llo_original>
// kernel: tpu_custom_call.1
$region0: #{tpu_custom_call.1}
  #allocation0 [shape = 'u32[]', space=smem, size = 0x4, offset = 0x4, fixed_abs, tag = 'smem constant byte address 0x4 - core index']
  #allocation1 [shape = 'u32[144,128]{1,0:T(1,128)}', space=vmem, size = 0x12000, scoped, tag = 'internal scratch']
  %s0 = inlined_call_operand.hbm [shape: f32[2,128,1024], index: 0, kind: input, shape index: {}]
  %s1 = inlined_call_operand.vmem [shape: f32[128,1], index: 1, kind: input, shape index: {}]
  %s2 = inlined_call_operand.vmem [shape: f32[128,8], index: 2, kind: input, shape index: {}]
  %s3 = inlined_call_operand.vmem [shape: f32[1,8], index: 3, kind: input, shape index: {}]
  %s4 = inlined_call_operand.vmem [shape: f32[1,8], index: 4, kind: input, shape index: {}]
  %s5 = inlined_call_operand.vmem [shape: f32[1,8], index: 5, kind: input, shape index: {}]
  %s6 = inlined_call_operand.vmem [shape: f32[8,128], index: 6, kind: input, shape index: {}]
  %s7 = inlined_call_operand.vmem [shape: f32[1,128], index: 7, kind: input, shape index: {}]
  %s8 = inlined_call_operand.hbm [shape: f32[2,128,1024], index: 8, kind: output, shape index: {}]
  %s9 = sld [smem:[#allocation0]]
  $region69: #{tpu_custom_call.1} parent=0
    _
  %s11 = ssub.s32 1, %s9
  %s12 = scalar_select 0, %s11, %s9
  $region1: #{tpu_custom_call.1} parent=0
    #allocation2 [shape = 'u8[1048576]{0}', space=vmem, size = 0x100000, scoped, tag = 'input window, operand 0']
    #allocation3 [shape = 's32[2]{0}', space=sflag, size = 0x8, scoped, tag = 'scoped memory for tpu_custom_call.1']
    #allocation4 [shape = 's32[2]{0}', space=sflag, size = 0x8, scoped, tag = 'scoped memory for tpu_custom_call.1']
    #allocation5 [shape = 'u8[1048576]{0}', space=vmem, size = 0x100000, scoped, tag = 'output window, operand 0']
    %13 = vsyncpa [#allocation3], 0
    %s14 = scalar_lea.sflag [#allocation3], 1
    %15 = vsyncpa %s14, 0
    %16 = vsyncpa [#allocation4], 0
    %s17 = scalar_lea.sflag [#allocation4], 1
    %18 = vsyncpa %s17, 0
    loop: start=0, step=1, limit=4
    $region2: #{tpu_custom_call.1} parent=1 // loop_pre_header
      _
    $region3: #{tpu_custom_call.1} parent=1 // loop_header
      %s20 = sphi 0, %s24
      %p21 = scmp.ge.s32.totalorder %s20, 4
      %s30 = sphi 0, %s32
      %s33 = sphi 0, %s30
      %s34 = sphi 0, %s33
      %s50 = sphi 0, %s34
      %s54 = sphi 0, %s54
      %s56 = sphi 0, %s54
      %s57 = sphi 0, %s56
      %s71 = sphi 0, %s57
      %s75 = sphi 0, %s75
      %s77 = sphi 0, %s75
      %s78 = sphi 0, %s77
      %s92 = sphi 0, %s78
      %s96 = sphi 0, %s96
      %s98 = sphi 0, %s96
      %s99 = sphi 0, %s98
      %s113 = sphi 0, %s99
      %s117 = sphi 0, %s117
      %s119 = sphi 0, %s117
      %s120 = sphi 0, %s119
      %s134 = sphi 0, %s120
      %s138 = sphi 0, %s138
      %s140 = sphi 0, %s138
      %s141 = sphi 0, %s140
      %s155 = sphi 0, %s141
      %s159 = sphi 0, %s159
      %s161 = sphi 0, %s159
      %s162 = sphi 0, %s161
      %s176 = sphi 0, %s162
      %s180 = sphi 0, %s180
      %s182 = sphi 0, %s180
      %s183 = sphi 0, %s182
      %s197 = sphi 0, %s183
      %s203 = sphi 0, %s205
      %s206 = sphi 0, %s203
      %s207 = sphi 0, %s206
      %s223 = sphi 0, %s207
    $region4: #{tpu_custom_call.1} parent=1 // loop_header_branch
      %23 = sbr.rel (%p21) target = $region8
    $region5: #{tpu_custom_call.1} parent=1 // loop_body
      %s25 = ssub.s32 %s20, 1
      %s26 = ssub.s32 %s20, 2
      %s27 = sadd.s32 %s20, 1
      %s28 = ssub.s32 %s20, %s27
      %p29 = scmp.eq.s32.totalorder %s28, 0
      %s31 = sadd.s32 %s30, 1
      %s32 = scalar_select %p29, %s30, %s31
      %p35 = pneg %p29
      %p36 = scmp.eq.s32.totalorder %s20, 1
      %p37 = por %p35, %p36
      %p38 = scmp.ne.s32.totalorder %s30, %s33
      %p39 = scmp.eq.s32.totalorder %s20, 0
      %p40 = por %p38, %p39
      %p41 = scmp.ne.s32.totalorder %s30, %s33
      %p42 = scmp.eq.s32.totalorder %s25, 1
      %p43 = por %p41, %p42
      %p44 = scmp.ne.s32.totalorder %s33, %s34
      %p45 = scmp.eq.s32.totalorder %s25, 0
      %p46 = por %p44, %p45
      %p47 = scmp.ne.s32.totalorder %s33, %s34
      %p48 = scmp.eq.s32.totalorder %s26, 1
      %p49 = por %p47, %p48
      %p51 = scmp.ne.s32.totalorder %s34, %s50
      %p52 = scmp.eq.s32.totalorder %s26, 0
      %p53 = por %p51, %p52
      %s55 = sadd.s32 %s54, 1
      %p58 = scmp.eq.s32.totalorder %s20, 1
      %p59 = scmp.ne.s32.totalorder %s54, %s56
      %p60 = scmp.eq.s32.totalorder %s20, 0
      %p61 = por %p59, %p60
      %p62 = scmp.ne.s32.totalorder %s54, %s56
      %p63 = scmp.eq.s32.totalorder %s25, 1
      %p64 = por %p62, %p63
      %p65 = scmp.ne.s32.totalorder %s56, %s57
      %p66 = scmp.eq.s32.totalorder %s25, 0
      %p67 = por %p65, %p66
      %p68 = scmp.ne.s32.totalorder %s56, %s57
      %p69 = scmp.eq.s32.totalorder %s26, 1
      %p70 = por %p68, %p69
      %p72 = scmp.ne.s32.totalorder %s57, %s71
      %p73 = scmp.eq.s32.totalorder %s26, 0
      %p74 = por %p72, %p73
      %s76 = sadd.s32 %s75, 1
      %p79 = scmp.eq.s32.totalorder %s20, 1
      %p80 = scmp.ne.s32.totalorder %s75, %s77
      %p81 = scmp.eq.s32.totalorder %s20, 0
      %p82 = por %p80, %p81
      %p83 = scmp.ne.s32.totalorder %s75, %s77
      %p84 = scmp.eq.s32.totalorder %s25, 1
      %p85 = por %p83, %p84
      %p86 = scmp.ne.s32.totalorder %s77, %s78
      %p87 = scmp.eq.s32.totalorder %s25, 0
      %p88 = por %p86, %p87
      %p89 = scmp.ne.s32.totalorder %s77, %s78
      %p90 = scmp.eq.s32.totalorder %s26, 1
      %p91 = por %p89, %p90
      %p93 = scmp.ne.s32.totalorder %s78, %s92
      %p94 = scmp.eq.s32.totalorder %s26, 0
      %p95 = por %p93, %p94
      %s97 = sadd.s32 %s96, 1
      %p100 = scmp.eq.s32.totalorder %s20, 1
      %p101 = scmp.ne.s32.totalorder %s96, %s98
      %p102 = scmp.eq.s32.totalorder %s20, 0
      %p103 = por %p101, %p102
      %p104 = scmp.ne.s32.totalorder %s96, %s98
      %p105 = scmp.eq.s32.totalorder %s25, 1
      %p106 = por %p104, %p105
      %p107 = scmp.ne.s32.totalorder %s98, %s99
      %p108 = scmp.eq.s32.totalorder %s25, 0
      %p109 = por %p107, %p108
      %p110 = scmp.ne.s32.totalorder %s98, %s99
      %p111 = scmp.eq.s32.totalorder %s26, 1
      %p112 = por %p110, %p111
      %p114 = scmp.ne.s32.totalorder %s99, %s113
      %p115 = scmp.eq.s32.totalorder %s26, 0
      %p116 = por %p114, %p115
      %s118 = sadd.s32 %s117, 1
      %p121 = scmp.eq.s32.totalorder %s20, 1
      %p122 = scmp.ne.s32.totalorder %s117, %s119
      %p123 = scmp.eq.s32.totalorder %s20, 0
      %p124 = por %p122, %p123
      %p125 = scmp.ne.s32.totalorder %s117, %s119
      %p126 = scmp.eq.s32.totalorder %s25, 1
      %p127 = por %p125, %p126
      %p128 = scmp.ne.s32.totalorder %s119, %s120
      %p129 = scmp.eq.s32.totalorder %s25, 0
      %p130 = por %p128, %p129
      %p131 = scmp.ne.s32.totalorder %s119, %s120
      %p132 = scmp.eq.s32.totalorder %s26, 1
      %p133 = por %p131, %p132
      %p135 = scmp.ne.s32.totalorder %s120, %s134
      %p136 = scmp.eq.s32.totalorder %s26, 0
      %p137 = por %p135, %p136
      %s139 = sadd.s32 %s138, 1
      %p142 = scmp.eq.s32.totalorder %s20, 1
      %p143 = scmp.ne.s32.totalorder %s138, %s140
      %p144 = scmp.eq.s32.totalorder %s20, 0
      %p145 = por %p143, %p144
      %p146 = scmp.ne.s32.totalorder %s138, %s140
      %p147 = scmp.eq.s32.totalorder %s25, 1
      %p148 = por %p146, %p147
      %p149 = scmp.ne.s32.totalorder %s140, %s141
      %p150 = scmp.eq.s32.totalorder %s25, 0
      %p151 = por %p149, %p150
      %p152 = scmp.ne.s32.totalorder %s140, %s141
      %p153 = scmp.eq.s32.totalorder %s26, 1
      %p154 = por %p152, %p153
      %p156 = scmp.ne.s32.totalorder %s141, %s155
      %p157 = scmp.eq.s32.totalorder %s26, 0
      %p158 = por %p156, %p157
      %s160 = sadd.s32 %s159, 1
      %p163 = scmp.eq.s32.totalorder %s20, 1
      %p164 = scmp.ne.s32.totalorder %s159, %s161
      %p165 = scmp.eq.s32.totalorder %s20, 0
      %p166 = por %p164, %p165
      %p167 = scmp.ne.s32.totalorder %s159, %s161
      %p168 = scmp.eq.s32.totalorder %s25, 1
      %p169 = por %p167, %p168
      %p170 = scmp.ne.s32.totalorder %s161, %s162
      %p171 = scmp.eq.s32.totalorder %s25, 0
      %p172 = por %p170, %p171
      %p173 = scmp.ne.s32.totalorder %s161, %s162
      %p174 = scmp.eq.s32.totalorder %s26, 1
      %p175 = por %p173, %p174
      %p177 = scmp.ne.s32.totalorder %s162, %s176
      %p178 = scmp.eq.s32.totalorder %s26, 0
      %p179 = por %p177, %p178
      %s181 = sadd.s32 %s180, 1
      %p184 = scmp.eq.s32.totalorder %s20, 1
      %p185 = scmp.ne.s32.totalorder %s180, %s182
      %p186 = scmp.eq.s32.totalorder %s20, 0
      %p187 = por %p185, %p186
      %p188 = scmp.ne.s32.totalorder %s180, %s182
      %p189 = scmp.eq.s32.totalorder %s25, 1
      %p190 = por %p188, %p189
      %p191 = scmp.ne.s32.totalorder %s182, %s183
      %p192 = scmp.eq.s32.totalorder %s25, 0
      %p193 = por %p191, %p192
      %p194 = scmp.ne.s32.totalorder %s182, %s183
      %p195 = scmp.eq.s32.totalorder %s26, 1
      %p196 = por %p194, %p195
      %p198 = scmp.ne.s32.totalorder %s183, %s197
      %p199 = scmp.eq.s32.totalorder %s26, 0
      %p200 = por %p198, %p199
      %s201 = ssub.s32 %s20, %s27
      %p202 = scmp.eq.s32.totalorder %s201, 0
      %s204 = sadd.s32 %s203, 1
      %s205 = scalar_select %p202, %s203, %s204
      %p208 = pneg %p202
      %p209 = scmp.eq.s32.totalorder %s20, 1
      %p210 = por %p208, %p209
      %p211 = scmp.ne.s32.totalorder %s203, %s206
      %p212 = scmp.eq.s32.totalorder %s20, 0
      %p213 = por %p211, %p212
      %p214 = scmp.ne.s32.totalorder %s203, %s206
      %p215 = scmp.eq.s32.totalorder %s25, 1
      %p216 = por %p214, %p215
      %p217 = scmp.ne.s32.totalorder %s206, %s207
      %p218 = scmp.eq.s32.totalorder %s25, 0
      %p219 = por %p217, %p218
      %p220 = scmp.ne.s32.totalorder %s206, %s207
      %p221 = scmp.eq.s32.totalorder %s26, 1
      %p222 = por %p220, %p221
      %p224 = scmp.ne.s32.totalorder %s207, %s223
      %p225 = scmp.eq.s32.totalorder %s26, 0
      %p226 = por %p224, %p225
      %p227 = scmp.le.s32.totalorder 1, %s20
      %p228 = scmp.lt.s32.totalorder %s20, 3
      %p229 = pnand %p227, %p228
      %p230 = pneg %p229
      // Predicated region
      $region9: #{tpu_custom_call.1} parent=5 // pred_check
        _
      $region10: #{tpu_custom_call.1} parent=5 // pred_check_branch
        %232 = sbr.rel (%p229) target = $region12
      $region11: #{tpu_custom_call.1} parent=5 // pred_region
        %s233 = ssub.s32 %s20, 1
        // Predicated region
        $region13: #{tpu_custom_call.1} parent=11 // pred_check
          %p234 = pneg %p67
        $region14: #{tpu_custom_call.1} parent=11 // pred_check_branch
          %236 = sbr.rel (%p234) target = $region16
        $region15: #{tpu_custom_call.1} parent=11 // pred_region
          _
        $region16: #{tpu_custom_call.1} parent=11 // pred_fallthru
          _
        // Predicated region
        $region17: #{tpu_custom_call.1} parent=11 // pred_check
          %p237 = pneg %p88
        $region18: #{tpu_custom_call.1} parent=11 // pred_check_branch
          %239 = sbr.rel (%p237) target = $region20
        $region19: #{tpu_custom_call.1} parent=11 // pred_region
          _
        $region20: #{tpu_custom_call.1} parent=11 // pred_fallthru
          _
        // Predicated region
        $region21: #{tpu_custom_call.1} parent=11 // pred_check
          %p240 = pneg %p109
        $region22: #{tpu_custom_call.1} parent=11 // pred_check_branch
          %242 = sbr.rel (%p240) target = $region24
        $region23: #{tpu_custom_call.1} parent=11 // pred_region
          _
        $region24: #{tpu_custom_call.1} parent=11 // pred_fallthru
          _
        // Predicated region
        $region25: #{tpu_custom_call.1} parent=11 // pred_check
          %p243 = pneg %p130
        $region26: #{tpu_custom_call.1} parent=11 // pred_check_branch
          %245 = sbr.rel (%p243) target = $region28
        $region27: #{tpu_custom_call.1} parent=11 // pred_region
          _
        $region28: #{tpu_custom_call.1} parent=11 // pred_fallthru
          _
        // Predicated region
        $region29: #{tpu_custom_call.1} parent=11 // pred_check
          %p246 = pneg %p151
        $region30: #{tpu_custom_call.1} parent=11 // pred_check_branch
          %248 = sbr.rel (%p246) target = $region32
        $region31: #{tpu_custom_call.1} parent=11 // pred_region
          _
        $region32: #{tpu_custom_call.1} parent=11 // pred_fallthru
          _
        // Predicated region
        $region33: #{tpu_custom_call.1} parent=11 // pred_check
          %p249 = pneg %p172
        $region34: #{tpu_custom_call.1} parent=11 // pred_check_branch
          %251 = sbr.rel (%p249) target = $region36
        $region35: #{tpu_custom_call.1} parent=11 // pred_region
          _
        $region36: #{tpu_custom_call.1} parent=11 // pred_fallthru
          _
        // Predicated region
        $region37: #{tpu_custom_call.1} parent=11 // pred_check
          %p252 = pneg %p193
        $region38: #{tpu_custom_call.1} parent=11 // pred_check_branch
          %254 = sbr.rel (%p252) target = $region40
        $region39: #{tpu_custom_call.1} parent=11 // pred_region
          _
        $region40: #{tpu_custom_call.1} parent=11 // pred_fallthru
          _
      $region12: #{tpu_custom_call.1} parent=5 // pred_fallthru
        _
      %p255 = scmp.lt.s32.totalorder %s20, 2
      // Predicated region
      $region41: #{tpu_custom_call.1} parent=5 // pred_check
        %p256 = pneg %p255
      $region42: #{tpu_custom_call.1} parent=5 // pred_check_branch
        %258 = sbr.rel (%p256) target = $region44
      $region43: #{tpu_custom_call.1} parent=5 // pred_region
        // Predicated region
        $region45: #{tpu_custom_call.1} parent=43 // pred_check
          %p259 = pneg %p40
        $region46: #{tpu_custom_call.1} parent=43 // pred_check_branch
          %261 = sbr.rel (%p259) target = $region48
        $region47: #{tpu_custom_call.1} parent=43 // pred_region
          %s262 = sand.u32 %s30, 1
          %s263 = scalar_lea.sflag [#allocation3], %s262
          %s264 = sand.u32 %s30, 1
          %s265 = smul.addr %s264, 1024
          %s266 = scalar_lea.vmem [#allocation2], %s265
          %s268 = ssub.s32 16384, 16384
          %269 = vsyncadd %s263, %s268
          %s270 = smul.addr %s20, 128
          %s271 = smul.addr %s270, 128
          %s272 = scalar_lea.hbm %s0, %s271
          %s273 = sshll.u32 %s266, 4
          %s274 = int_to_ptr.vmem [resolvable:$true] %s273
          %279 = dma.hbm_to_vmem [thread:$0]  %s272, 16384, %s274, %s263, 1024, 1024, 64
        $region48: #{tpu_custom_call.1} parent=43 // pred_fallthru
          _
      $region44: #{tpu_custom_call.1} parent=5 // pred_fallthru
        _
      %p280 = scmp.le.s32.totalorder 1, %s20
      %p281 = scmp.lt.s32.totalorder %s20, 3
      %p282 = pnand %p280, %p281
      %p283 = pneg %p282
      // Predicated region
      $region49: #{tpu_custom_call.1} parent=5 // pred_check
        _
      $region50: #{tpu_custom_call.1} parent=5 // pred_check_branch
        %285 = sbr.rel (%p282) target = $region52
      $region51: #{tpu_custom_call.1} parent=5 // pred_region
        %s286 = ssub.s32 %s20, 1
        %s287 = sand.u32 %s33, 1
        %s288 = scalar_lea.sflag [#allocation3], %s287
        %s289 = sand.u32 %s33, 1
        %s290 = smul.addr %s289, 1024
        %s291 = scalar_lea.vmem [#allocation2], %s290
        // Predicated region
        $region53: #{tpu_custom_call.1} parent=51 // pred_check
          %p292 = pneg %p46
        $region54: #{tpu_custom_call.1} parent=51 // pred_check_branch
          %294 = sbr.rel (%p292) target = $region56
        $region55: #{tpu_custom_call.1} parent=51 // pred_region
          %295 = dma.done %s288, 16384
        $region56: #{tpu_custom_call.1} parent=51 // pred_fallthru
          _
        %s296 = sand.u32 %s33, 1
        %s297 = scalar_lea.sflag [#allocation3], %s296
        %s298 = sand.u32 %s33, 1
        %s299 = smul.addr %s298, 1024
        %s300 = scalar_lea.vmem [#allocation2], %s299
        %p301 = pneg %p46
        %p302 = pneg %p43
        %p303 = pneg %p67
        %p304 = pneg %p64
        %p305 = pneg %p88
        %p306 = pneg %p85
        %p307 = pneg %p109
        %p308 = pneg %p106
        %p309 = pneg %p130
        %p310 = pneg %p127
        %p311 = pneg %p151
        %p312 = pneg %p148
        %p313 = pneg %p172
        %p314 = pneg %p169
        %p315 = pneg %p193
        %p316 = pneg %p190
        %p317 = pneg %p219
        %p318 = pneg %p216
        %s319 = sand.u32 %s206, 1
        %s320 = scalar_lea.sflag [#allocation4], %s319
        %s321 = sand.u32 %s206, 1
        %s322 = smul.addr %s321, 1024
        %s323 = scalar_lea.vmem [#allocation5], %s322
        %v324 = vld [vmem:[%s291] sm:$0xff]
        %v325 = vld [vmem:[%s291 + $0x8] sm:$0xff]
        %v326 = vld [vmem:[%s291 + $0x10] sm:$0xff]
        %v327 = vld [vmem:[%s291 + $0x18] sm:$0xff]
        %v328 = vld [vmem:[%s291 + $0x20] sm:$0xff]
        %v329 = vld [vmem:[%s291 + $0x28] sm:$0xff]
        %v330 = vld [vmem:[%s291 + $0x30] sm:$0xff]
        %v331 = vld [vmem:[%s291 + $0x38] sm:$0xff]
        %v332 = vld [vmem:[%s291 + $0x40] sm:$0xff]
        %v333 = vld [vmem:[%s291 + $0x48] sm:$0xff]
        %v334 = vld [vmem:[%s291 + $0x50] sm:$0xff]
        %v335 = vld [vmem:[%s291 + $0x58] sm:$0xff]
        %v336 = vld [vmem:[%s291 + $0x60] sm:$0xff]
        %v337 = vld [vmem:[%s291 + $0x68] sm:$0xff]
        %v338 = vld [vmem:[%s291 + $0x70] sm:$0xff]
        %v339 = vld [vmem:[%s291 + $0x78] sm:$0xff]
        %v340 = vld [vmem:[%s291 + $0x80] sm:$0xff]
        %v341 = vld [vmem:[%s291 + $0x88] sm:$0xff]
        %v342 = vld [vmem:[%s291 + $0x90] sm:$0xff]
        %v343 = vld [vmem:[%s291 + $0x98] sm:$0xff]
        %v344 = vld [vmem:[%s291 + $0xa0] sm:$0xff]
        %v345 = vld [vmem:[%s291 + $0xa8] sm:$0xff]
        %v346 = vld [vmem:[%s291 + $0xb0] sm:$0xff]
        %v347 = vld [vmem:[%s291 + $0xb8] sm:$0xff]
        %v348 = vld [vmem:[%s291 + $0xc0] sm:$0xff]
        %v349 = vld [vmem:[%s291 + $0xc8] sm:$0xff]
        %v350 = vld [vmem:[%s291 + $0xd0] sm:$0xff]
        %v351 = vld [vmem:[%s291 + $0xd8] sm:$0xff]
        %v352 = vld [vmem:[%s291 + $0xe0] sm:$0xff]
        %v353 = vld [vmem:[%s291 + $0xe8] sm:$0xff]
        %v354 = vld [vmem:[%s291 + $0xf0] sm:$0xff]
        %v355 = vld [vmem:[%s291 + $0xf8] sm:$0xff]
        %v356 = vld [vmem:[%s291 + $0x100] sm:$0xff]
        %v357 = vld [vmem:[%s291 + $0x108] sm:$0xff]
        %v358 = vld [vmem:[%s291 + $0x110] sm:$0xff]
        %v359 = vld [vmem:[%s291 + $0x118] sm:$0xff]
        %v360 = vld [vmem:[%s291 + $0x120] sm:$0xff]
        %v361 = vld [vmem:[%s291 + $0x128] sm:$0xff]
        %v362 = vld [vmem:[%s291 + $0x130] sm:$0xff]
        %v363 = vld [vmem:[%s291 + $0x138] sm:$0xff]
        %v364 = vld [vmem:[%s291 + $0x140] sm:$0xff]
        %v365 = vld [vmem:[%s291 + $0x148] sm:$0xff]
        %v366 = vld [vmem:[%s291 + $0x150] sm:$0xff]
        %v367 = vld [vmem:[%s291 + $0x158] sm:$0xff]
        %v368 = vld [vmem:[%s291 + $0x160] sm:$0xff]
        %v369 = vld [vmem:[%s291 + $0x168] sm:$0xff]
        %v370 = vld [vmem:[%s291 + $0x170] sm:$0xff]
        %v371 = vld [vmem:[%s291 + $0x178] sm:$0xff]
        %v372 = vld [vmem:[%s291 + $0x180] sm:$0xff]
        %v373 = vld [vmem:[%s291 + $0x188] sm:$0xff]
        %v374 = vld [vmem:[%s291 + $0x190] sm:$0xff]
        %v375 = vld [vmem:[%s291 + $0x198] sm:$0xff]
        %v376 = vld [vmem:[%s291 + $0x1a0] sm:$0xff]
        %v377 = vld [vmem:[%s291 + $0x1a8] sm:$0xff]
        %v378 = vld [vmem:[%s291 + $0x1b0] sm:$0xff]
        %v379 = vld [vmem:[%s291 + $0x1b8] sm:$0xff]
        %v380 = vld [vmem:[%s291 + $0x1c0] sm:$0xff]
        %v381 = vld [vmem:[%s291 + $0x1c8] sm:$0xff]
        %v382 = vld [vmem:[%s291 + $0x1d0] sm:$0xff]
        %v383 = vld [vmem:[%s291 + $0x1d8] sm:$0xff]
        %v384 = vld [vmem:[%s291 + $0x1e0] sm:$0xff]
        %v385 = vld [vmem:[%s291 + $0x1e8] sm:$0xff]
        %v386 = vld [vmem:[%s291 + $0x1f0] sm:$0xff]
        %v387 = vld [vmem:[%s291 + $0x1f8] sm:$0xff]
        %v388 = vld [vmem:[%s291 + $0x200] sm:$0xff]
        %v389 = vld [vmem:[%s291 + $0x208] sm:$0xff]
        %v390 = vld [vmem:[%s291 + $0x210] sm:$0xff]
        %v391 = vld [vmem:[%s291 + $0x218] sm:$0xff]
        %v392 = vld [vmem:[%s291 + $0x220] sm:$0xff]
        %v393 = vld [vmem:[%s291 + $0x228] sm:$0xff]
        %v394 = vld [vmem:[%s291 + $0x230] sm:$0xff]
        %v395 = vld [vmem:[%s291 + $0x238] sm:$0xff]
        %v396 = vld [vmem:[%s291 + $0x240] sm:$0xff]
        %v397 = vld [vmem:[%s291 + $0x248] sm:$0xff]
        %v398 = vld [vmem:[%s291 + $0x250] sm:$0xff]
        %v399 = vld [vmem:[%s291 + $0x258] sm:$0xff]
        %v400 = vld [vmem:[%s291 + $0x260] sm:$0xff]
        %v401 = vld [vmem:[%s291 + $0x268] sm:$0xff]
        %v402 = vld [vmem:[%s291 + $0x270] sm:$0xff]
        %v403 = vld [vmem:[%s291 + $0x278] sm:$0xff]
        %v404 = vld [vmem:[%s291 + $0x280] sm:$0xff]
        %v405 = vld [vmem:[%s291 + $0x288] sm:$0xff]
        %v406 = vld [vmem:[%s291 + $0x290] sm:$0xff]
        %v407 = vld [vmem:[%s291 + $0x298] sm:$0xff]
        %v408 = vld [vmem:[%s291 + $0x2a0] sm:$0xff]
        %v409 = vld [vmem:[%s291 + $0x2a8] sm:$0xff]
        %v410 = vld [vmem:[%s291 + $0x2b0] sm:$0xff]
        %v411 = vld [vmem:[%s291 + $0x2b8] sm:$0xff]
        %v412 = vld [vmem:[%s291 + $0x2c0] sm:$0xff]
        %v413 = vld [vmem:[%s291 + $0x2c8] sm:$0xff]
        %v414 = vld [vmem:[%s291 + $0x2d0] sm:$0xff]
        %v415 = vld [vmem:[%s291 + $0x2d8] sm:$0xff]
        %v416 = vld [vmem:[%s291 + $0x2e0] sm:$0xff]
        %v417 = vld [vmem:[%s291 + $0x2e8] sm:$0xff]
        %v418 = vld [vmem:[%s291 + $0x2f0] sm:$0xff]
        %v419 = vld [vmem:[%s291 + $0x2f8] sm:$0xff]
        %v420 = vld [vmem:[%s291 + $0x300] sm:$0xff]
        %v421 = vld [vmem:[%s291 + $0x308] sm:$0xff]
        %v422 = vld [vmem:[%s291 + $0x310] sm:$0xff]
        %v423 = vld [vmem:[%s291 + $0x318] sm:$0xff]
        %v424 = vld [vmem:[%s291 + $0x320] sm:$0xff]
        %v425 = vld [vmem:[%s291 + $0x328] sm:$0xff]
        %v426 = vld [vmem:[%s291 + $0x330] sm:$0xff]
        %v427 = vld [vmem:[%s291 + $0x338] sm:$0xff]
        %v428 = vld [vmem:[%s291 + $0x340] sm:$0xff]
        %v429 = vld [vmem:[%s291 + $0x348] sm:$0xff]
        %v430 = vld [vmem:[%s291 + $0x350] sm:$0xff]
        %v431 = vld [vmem:[%s291 + $0x358] sm:$0xff]
        %v432 = vld [vmem:[%s291 + $0x360] sm:$0xff]
        %v433 = vld [vmem:[%s291 + $0x368] sm:$0xff]
        %v434 = vld [vmem:[%s291 + $0x370] sm:$0xff]
        %v435 = vld [vmem:[%s291 + $0x378] sm:$0xff]
        %v436 = vld [vmem:[%s291 + $0x380] sm:$0xff]
        %v437 = vld [vmem:[%s291 + $0x388] sm:$0xff]
        %v438 = vld [vmem:[%s291 + $0x390] sm:$0xff]
        %v439 = vld [vmem:[%s291 + $0x398] sm:$0xff]
        %v440 = vld [vmem:[%s291 + $0x3a0] sm:$0xff]
        %v441 = vld [vmem:[%s291 + $0x3a8] sm:$0xff]
        %v442 = vld [vmem:[%s291 + $0x3b0] sm:$0xff]
        %v443 = vld [vmem:[%s291 + $0x3b8] sm:$0xff]
        %v444 = vld [vmem:[%s291 + $0x3c0] sm:$0xff]
        %v445 = vld [vmem:[%s291 + $0x3c8] sm:$0xff]
        %v446 = vld [vmem:[%s291 + $0x3d0] sm:$0xff]
        %v447 = vld [vmem:[%s291 + $0x3d8] sm:$0xff]
        %v448 = vld [vmem:[%s291 + $0x3e0] sm:$0xff]
        %v449 = vld [vmem:[%s291 + $0x3e8] sm:$0xff]
        %v450 = vld [vmem:[%s291 + $0x3f0] sm:$0xff]
        %v451 = vld [vmem:[%s291 + $0x3f8] sm:$0xff]
        %v452 = vld [vmem:[%s1] sm:$0xff]
        %v453 = vld [vmem:[%s1 + $0x8] sm:$0xff]
        %v454 = vld [vmem:[%s1 + $0x10] sm:$0xff]
        %v455 = vld [vmem:[%s1 + $0x18] sm:$0xff]
        %v456 = vld [vmem:[%s1 + $0x20] sm:$0xff]
        %v457 = vld [vmem:[%s1 + $0x28] sm:$0xff]
        %v458 = vld [vmem:[%s1 + $0x30] sm:$0xff]
        %v459 = vld [vmem:[%s1 + $0x38] sm:$0xff]
        %v460 = vld [vmem:[%s1 + $0x40] sm:$0xff]
        %v461 = vld [vmem:[%s1 + $0x48] sm:$0xff]
        %v462 = vld [vmem:[%s1 + $0x50] sm:$0xff]
        %v463 = vld [vmem:[%s1 + $0x58] sm:$0xff]
        %v464 = vld [vmem:[%s1 + $0x60] sm:$0xff]
        %v465 = vld [vmem:[%s1 + $0x68] sm:$0xff]
        %v466 = vld [vmem:[%s1 + $0x70] sm:$0xff]
        %v467 = vld [vmem:[%s1 + $0x78] sm:$0xff]
        %469 = vset.pattern.permute.xlu0 0
        %470 = vperm.xlu0 %469, %v452
        %v471 = vpop.permute.xlu0 %470
        %474 = vset.pattern.permute.xlu0 0
        %475 = vperm.xlu0 %474, %v453
        %v476 = vpop.permute.xlu0 %475
        %479 = vset.pattern.permute.xlu0 0
        %480 = vperm.xlu0 %479, %v454
        %v481 = vpop.permute.xlu0 %480
        %484 = vset.pattern.permute.xlu0 0
        %485 = vperm.xlu0 %484, %v455
        %v486 = vpop.permute.xlu0 %485
        %489 = vset.pattern.permute.xlu0 0
        %490 = vperm.xlu0 %489, %v456
        %v491 = vpop.permute.xlu0 %490
        %494 = vset.pattern.permute.xlu0 0
        %495 = vperm.xlu0 %494, %v457
        %v496 = vpop.permute.xlu0 %495
        %499 = vset.pattern.permute.xlu0 0
        %500 = vperm.xlu0 %499, %v458
        %v501 = vpop.permute.xlu0 %500
        %504 = vset.pattern.permute.xlu0 0
        %505 = vperm.xlu0 %504, %v459
        %v506 = vpop.permute.xlu0 %505
        %509 = vset.pattern.permute.xlu0 0
        %510 = vperm.xlu0 %509, %v460
        %v511 = vpop.permute.xlu0 %510
        %514 = vset.pattern.permute.xlu0 0
        %515 = vperm.xlu0 %514, %v461
        %v516 = vpop.permute.xlu0 %515
        %519 = vset.pattern.permute.xlu0 0
        %520 = vperm.xlu0 %519, %v462
        %v521 = vpop.permute.xlu0 %520
        %524 = vset.pattern.permute.xlu0 0
        %525 = vperm.xlu0 %524, %v463
        %v526 = vpop.permute.xlu0 %525
        %529 = vset.pattern.permute.xlu0 0
        %530 = vperm.xlu0 %529, %v464
        %v531 = vpop.permute.xlu0 %530
        %534 = vset.pattern.permute.xlu0 0
        %535 = vperm.xlu0 %534, %v465
        %v536 = vpop.permute.xlu0 %535
        %539 = vset.pattern.permute.xlu0 0
        %540 = vperm.xlu0 %539, %v466
        %v541 = vpop.permute.xlu0 %540
        %544 = vset.pattern.permute.xlu0 0
        %545 = vperm.xlu0 %544, %v467
        %v546 = vpop.permute.xlu0 %545
        %v548 = vmul.f32 %v324, %v471
        %v549 = vmul.f32 %v325, %v471
        %v550 = vmul.f32 %v326, %v471
        %v551 = vmul.f32 %v327, %v471
        %v552 = vmul.f32 %v328, %v471
        %v553 = vmul.f32 %v329, %v471
        %v554 = vmul.f32 %v330, %v471
        %v555 = vmul.f32 %v331, %v471
        %v556 = vmul.f32 %v332, %v476
        %v557 = vmul.f32 %v333, %v476
        %v558 = vmul.f32 %v334, %v476
        %v559 = vmul.f32 %v335, %v476
        %v560 = vmul.f32 %v336, %v476
        %v561 = vmul.f32 %v337, %v476
        %v562 = vmul.f32 %v338, %v476
        %v563 = vmul.f32 %v339, %v476
        %v564 = vmul.f32 %v340, %v481
        %v565 = vmul.f32 %v341, %v481
        %v566 = vmul.f32 %v342, %v481
        %v567 = vmul.f32 %v343, %v481
        %v568 = vmul.f32 %v344, %v481
        %v569 = vmul.f32 %v345, %v481
        %v570 = vmul.f32 %v346, %v481
        %v571 = vmul.f32 %v347, %v481
        %v572 = vmul.f32 %v348, %v486
        %v573 = vmul.f32 %v349, %v486
        %v574 = vmul.f32 %v350, %v486
        %v575 = vmul.f32 %v351, %v486
        %v576 = vmul.f32 %v352, %v486
        %v577 = vmul.f32 %v353, %v486
        %v578 = vmul.f32 %v354, %v486
        %v579 = vmul.f32 %v355, %v486
        %v580 = vmul.f32 %v356, %v491
        %v581 = vmul.f32 %v357, %v491
        %v582 = vmul.f32 %v358, %v491
        %v583 = vmul.f32 %v359, %v491
        %v584 = vmul.f32 %v360, %v491
        %v585 = vmul.f32 %v361, %v491
        %v586 = vmul.f32 %v362, %v491
        %v587 = vmul.f32 %v363, %v491
        %v588 = vmul.f32 %v364, %v496
        %v589 = vmul.f32 %v365, %v496
        %v590 = vmul.f32 %v366, %v496
        %v591 = vmul.f32 %v367, %v496
        %v592 = vmul.f32 %v368, %v496
        %v593 = vmul.f32 %v369, %v496
        %v594 = vmul.f32 %v370, %v496
        %v595 = vmul.f32 %v371, %v496
        %v596 = vmul.f32 %v372, %v501
        %v597 = vmul.f32 %v373, %v501
        %v598 = vmul.f32 %v374, %v501
        %v599 = vmul.f32 %v375, %v501
        %v600 = vmul.f32 %v376, %v501
        %v601 = vmul.f32 %v377, %v501
        %v602 = vmul.f32 %v378, %v501
        %v603 = vmul.f32 %v379, %v501
        %v604 = vmul.f32 %v380, %v506
        %v605 = vmul.f32 %v381, %v506
        %v606 = vmul.f32 %v382, %v506
        %v607 = vmul.f32 %v383, %v506
        %v608 = vmul.f32 %v384, %v506
        %v609 = vmul.f32 %v385, %v506
        %v610 = vmul.f32 %v386, %v506
        %v611 = vmul.f32 %v387, %v506
        %v612 = vmul.f32 %v388, %v511
        %v613 = vmul.f32 %v389, %v511
        %v614 = vmul.f32 %v390, %v511
        %v615 = vmul.f32 %v391, %v511
        %v616 = vmul.f32 %v392, %v511
        %v617 = vmul.f32 %v393, %v511
        %v618 = vmul.f32 %v394, %v511
        %v619 = vmul.f32 %v395, %v511
        %v620 = vmul.f32 %v396, %v516
        %v621 = vmul.f32 %v397, %v516
        %v622 = vmul.f32 %v398, %v516
        %v623 = vmul.f32 %v399, %v516
        %v624 = vmul.f32 %v400, %v516
        %v625 = vmul.f32 %v401, %v516
        %v626 = vmul.f32 %v402, %v516
        %v627 = vmul.f32 %v403, %v516
        %v628 = vmul.f32 %v404, %v521
        %v629 = vmul.f32 %v405, %v521
        %v630 = vmul.f32 %v406, %v521
        %v631 = vmul.f32 %v407, %v521
        %v632 = vmul.f32 %v408, %v521
        %v633 = vmul.f32 %v409, %v521
        %v634 = vmul.f32 %v410, %v521
        %v635 = vmul.f32 %v411, %v521
        %v636 = vmul.f32 %v412, %v526
        %v637 = vmul.f32 %v413, %v526
        %v638 = vmul.f32 %v414, %v526
        %v639 = vmul.f32 %v415, %v526
        %v640 = vmul.f32 %v416, %v526
        %v641 = vmul.f32 %v417, %v526
        %v642 = vmul.f32 %v418, %v526
        %v643 = vmul.f32 %v419, %v526
        %v644 = vmul.f32 %v420, %v531
        %v645 = vmul.f32 %v421, %v531
        %v646 = vmul.f32 %v422, %v531
        %v647 = vmul.f32 %v423, %v531
        %v648 = vmul.f32 %v424, %v531
        %v649 = vmul.f32 %v425, %v531
        %v650 = vmul.f32 %v426, %v531
        %v651 = vmul.f32 %v427, %v531
        %v652 = vmul.f32 %v428, %v536
        %v653 = vmul.f32 %v429, %v536
        %v654 = vmul.f32 %v430, %v536
        %v655 = vmul.f32 %v431, %v536
        %v656 = vmul.f32 %v432, %v536
        %v657 = vmul.f32 %v433, %v536
        %v658 = vmul.f32 %v434, %v536
        %v659 = vmul.f32 %v435, %v536
        %v660 = vmul.f32 %v436, %v541
        %v661 = vmul.f32 %v437, %v541
        %v662 = vmul.f32 %v438, %v541
        %v663 = vmul.f32 %v439, %v541
        %v664 = vmul.f32 %v440, %v541
        %v665 = vmul.f32 %v441, %v541
        %v666 = vmul.f32 %v442, %v541
        %v667 = vmul.f32 %v443, %v541
        %v668 = vmul.f32 %v444, %v546
        %v669 = vmul.f32 %v445, %v546
        %v670 = vmul.f32 %v446, %v546
        %v671 = vmul.f32 %v447, %v546
        %v672 = vmul.f32 %v448, %v546
        %v673 = vmul.f32 %v449, %v546
        %v674 = vmul.f32 %v450, %v546
        %v675 = vmul.f32 %v451, %v546
        %v676 = vadd.f32 %v548, %v556
        %v677 = vadd.f32 %v676, %v564
        %v678 = vadd.f32 %v677, %v572
        %v679 = vadd.f32 %v678, %v580
        %v680 = vadd.f32 %v679, %v588
        %v681 = vadd.f32 %v680, %v596
        %v682 = vadd.f32 %v681, %v604
        %v683 = vadd.f32 %v682, %v612
        %v684 = vadd.f32 %v683, %v620
        %v685 = vadd.f32 %v684, %v628
        %v686 = vadd.f32 %v685, %v636
        %v687 = vadd.f32 %v686, %v644
        %v688 = vadd.f32 %v687, %v652
        %v689 = vadd.f32 %v688, %v660
        %v690 = vadd.f32 %v689, %v668
        %v691 = vrot.slane %v690, 4
        %v692 = vadd.f32 %v690, %v691
        %v693 = vrot.slane %v692, 2
        %v694 = vadd.f32 %v692, %v693
        %v695 = vrot.slane %v694, 1
        %v696 = vadd.f32 %v694, %v695
        %v697 = vadd.f32 %v549, %v557
        %v698 = vadd.f32 %v697, %v565
        %v699 = vadd.f32 %v698, %v573
        %v700 = vadd.f32 %v699, %v581
        %v701 = vadd.f32 %v700, %v589
        %v702 = vadd.f32 %v701, %v597
        %v703 = vadd.f32 %v702, %v605
        %v704 = vadd.f32 %v703, %v613
        %v705 = vadd.f32 %v704, %v621
        %v706 = vadd.f32 %v705, %v629
        %v707 = vadd.f32 %v706, %v637
        %v708 = vadd.f32 %v707, %v645
        %v709 = vadd.f32 %v708, %v653
        %v710 = vadd.f32 %v709, %v661
        %v711 = vadd.f32 %v710, %v669
        %v712 = vrot.slane %v711, 4
        %v713 = vadd.f32 %v711, %v712
        %v714 = vrot.slane %v713, 2
        %v715 = vadd.f32 %v713, %v714
        %v716 = vrot.slane %v715, 1
        %v717 = vadd.f32 %v715, %v716
        %v718 = vadd.f32 %v550, %v558
        %v719 = vadd.f32 %v718, %v566
        %v720 = vadd.f32 %v719, %v574
        %v721 = vadd.f32 %v720, %v582
        %v722 = vadd.f32 %v721, %v590
        %v723 = vadd.f32 %v722, %v598
        %v724 = vadd.f32 %v723, %v606
        %v725 = vadd.f32 %v724, %v614
        %v726 = vadd.f32 %v725, %v622
        %v727 = vadd.f32 %v726, %v630
        %v728 = vadd.f32 %v727, %v638
        %v729 = vadd.f32 %v728, %v646
        %v730 = vadd.f32 %v729, %v654
        %v731 = vadd.f32 %v730, %v662
        %v732 = vadd.f32 %v731, %v670
        %v733 = vrot.slane %v732, 4
        %v734 = vadd.f32 %v732, %v733
        %v735 = vrot.slane %v734, 2
        %v736 = vadd.f32 %v734, %v735
        %v737 = vrot.slane %v736, 1
        %v738 = vadd.f32 %v736, %v737
        %v739 = vadd.f32 %v551, %v559
        %v740 = vadd.f32 %v739, %v567
        %v741 = vadd.f32 %v740, %v575
        %v742 = vadd.f32 %v741, %v583
        %v743 = vadd.f32 %v742, %v591
        %v744 = vadd.f32 %v743, %v599
        %v745 = vadd.f32 %v744, %v607
        %v746 = vadd.f32 %v745, %v615
        %v747 = vadd.f32 %v746, %v623
        %v748 = vadd.f32 %v747, %v631
        %v749 = vadd.f32 %v748, %v639
        %v750 = vadd.f32 %v749, %v647
        %v751 = vadd.f32 %v750, %v655
        %v752 = vadd.f32 %v751, %v663
        %v753 = vadd.f32 %v752, %v671
        %v754 = vrot.slane %v753, 4
        %v755 = vadd.f32 %v753, %v754
        %v756 = vrot.slane %v755, 2
        %v757 = vadd.f32 %v755, %v756
        %v758 = vrot.slane %v757, 1
        %v759 = vadd.f32 %v757, %v758
        %v760 = vadd.f32 %v552, %v560
        %v761 = vadd.f32 %v760, %v568
        %v762 = vadd.f32 %v761, %v576
        %v763 = vadd.f32 %v762, %v584
        %v764 = vadd.f32 %v763, %v592
        %v765 = vadd.f32 %v764, %v600
        %v766 = vadd.f32 %v765, %v608
        %v767 = vadd.f32 %v766, %v616
        %v768 = vadd.f32 %v767, %v624
        %v769 = vadd.f32 %v768, %v632
        %v770 = vadd.f32 %v769, %v640
        %v771 = vadd.f32 %v770, %v648
        %v772 = vadd.f32 %v771, %v656
        %v773 = vadd.f32 %v772, %v664
        %v774 = vadd.f32 %v773, %v672
        %v775 = vrot.slane %v774, 4
        %v776 = vadd.f32 %v774, %v775
        %v777 = vrot.slane %v776, 2
        %v778 = vadd.f32 %v776, %v777
        %v779 = vrot.slane %v778, 1
        %v780 = vadd.f32 %v778, %v779
        %v781 = vadd.f32 %v553, %v561
        %v782 = vadd.f32 %v781, %v569
        %v783 = vadd.f32 %v782, %v577
        %v784 = vadd.f32 %v783, %v585
        %v785 = vadd.f32 %v784, %v593
        %v786 = vadd.f32 %v785, %v601
        %v787 = vadd.f32 %v786, %v609
        %v788 = vadd.f32 %v787, %v617
        %v789 = vadd.f32 %v788, %v625
        %v790 = vadd.f32 %v789, %v633
        %v791 = vadd.f32 %v790, %v641
        %v792 = vadd.f32 %v791, %v649
        %v793 = vadd.f32 %v792, %v657
        %v794 = vadd.f32 %v793, %v665
        %v795 = vadd.f32 %v794, %v673
        %v796 = vrot.slane %v795, 4
        %v797 = vadd.f32 %v795, %v796
        %v798 = vrot.slane %v797, 2
        %v799 = vadd.f32 %v797, %v798
        %v800 = vrot.slane %v799, 1
        %v801 = vadd.f32 %v799, %v800
        %v802 = vadd.f32 %v554, %v562
        %v803 = vadd.f32 %v802, %v570
        %v804 = vadd.f32 %v803, %v578
        %v805 = vadd.f32 %v804, %v586
        %v806 = vadd.f32 %v805, %v594
        %v807 = vadd.f32 %v806, %v602
        %v808 = vadd.f32 %v807, %v610
        %v809 = vadd.f32 %v808, %v618
        %v810 = vadd.f32 %v809, %v626
        %v811 = vadd.f32 %v810, %v634
        %v812 = vadd.f32 %v811, %v642
        %v813 = vadd.f32 %v812, %v650
        %v814 = vadd.f32 %v813, %v658
        %v815 = vadd.f32 %v814, %v666
        %v816 = vadd.f32 %v815, %v674
        %v817 = vrot.slane %v816, 4
        %v818 = vadd.f32 %v816, %v817
        %v819 = vrot.slane %v818, 2
        %v820 = vadd.f32 %v818, %v819
        %v821 = vrot.slane %v820, 1
        %v822 = vadd.f32 %v820, %v821
        %v823 = vadd.f32 %v555, %v563
        %v824 = vadd.f32 %v823, %v571
        %v825 = vadd.f32 %v824, %v579
        %v826 = vadd.f32 %v825, %v587
        %v827 = vadd.f32 %v826, %v595
        %v828 = vadd.f32 %v827, %v603
        %v829 = vadd.f32 %v828, %v611
        %v830 = vadd.f32 %v829, %v619
        %v831 = vadd.f32 %v830, %v627
        %v832 = vadd.f32 %v831, %v635
        %v833 = vadd.f32 %v832, %v643
        %v834 = vadd.f32 %v833, %v651
        %v835 = vadd.f32 %v834, %v659
        %v836 = vadd.f32 %v835, %v667
        %v837 = vadd.f32 %v836, %v675
        %v838 = vrot.slane %v837, 4
        %v839 = vadd.f32 %v837, %v838
        %v840 = vrot.slane %v839, 2
        %v841 = vadd.f32 %v839, %v840
        %v842 = vrot.slane %v841, 1
        %v843 = vadd.f32 %v841, %v842
        %v844 = vmax.f32 %v696, %v780
        %v845 = vmax.f32 %v717, %v801
        %v846 = vmax.f32 %v738, %v822
        %v847 = vmax.f32 %v759, %v843
        %v848 = vmax.f32 %v844, %v845
        %v849 = vmax.f32 %v846, %v847
        %v850 = vmax.f32 %v848, %v849
        %851 = vmax.xlane.f32.xlu0 %v850
        %v852 = vpop.xlane.xlu0 %851
        %v853 = vsub.f32 %v696, %v852
        %v854 = vsub.f32 %v717, %v852
        %v855 = vsub.f32 %v738, %v852
        %v856 = vsub.f32 %v759, %v852
        %v857 = vsub.f32 %v780, %v852
        %v858 = vsub.f32 %v801, %v852
        %v859 = vsub.f32 %v822, %v852
        %v860 = vsub.f32 %v843, %v852
        %v861 = vmul.f32 %v853, 1.442695
        %v862 = vpow.pop %v861
        %v863 = vmul.f32 %v854, 1.442695
        %v864 = vpow.pop %v863
        %v865 = vmul.f32 %v855, 1.442695
        %v866 = vpow.pop %v865
        %v867 = vmul.f32 %v856, 1.442695
        %v868 = vpow.pop %v867
        %v869 = vmul.f32 %v857, 1.442695
        %v870 = vpow.pop %v869
        %v871 = vmul.f32 %v858, 1.442695
        %v872 = vpow.pop %v871
        %v873 = vmul.f32 %v859, 1.442695
        %v874 = vpow.pop %v873
        %v875 = vmul.f32 %v860, 1.442695
        %v876 = vpow.pop %v875
        %v877 = vadd.f32 %v862, %v864
        %v878 = vadd.f32 %v877, %v866
        %v879 = vadd.f32 %v878, %v868
        %v880 = vadd.f32 %v879, %v870
        %v881 = vadd.f32 %v880, %v872
        %v882 = vadd.f32 %v881, %v874
        %v883 = vadd.f32 %v882, %v876
        %884 = vadd.xlane.f32.xlu0 %v883
        %v885 = vpop.xlane.xlu0 %884
        %v886 = vrcp.pop %v885
        %v887 = vmul.f32 %v324, %v862
        %v888 = vmul.f32 %v325, %v864
        %v889 = vmul.f32 %v326, %v866
        %v890 = vmul.f32 %v327, %v868
        %v891 = vmul.f32 %v328, %v870
        %v892 = vmul.f32 %v329, %v872
        %v893 = vmul.f32 %v330, %v874
        %v894 = vmul.f32 %v331, %v876
        %v895 = vmul.f32 %v332, %v862
        %v896 = vmul.f32 %v333, %v864
        %v897 = vmul.f32 %v334, %v866
        %v898 = vmul.f32 %v335, %v868
        %v899 = vmul.f32 %v336, %v870
        %v900 = vmul.f32 %v337, %v872
        %v901 = vmul.f32 %v338, %v874
        %v902 = vmul.f32 %v339, %v876
        %v903 = vmul.f32 %v340, %v862
        %v904 = vmul.f32 %v341, %v864
        %v905 = vmul.f32 %v342, %v866
        %v906 = vmul.f32 %v343, %v868
        %v907 = vmul.f32 %v344, %v870
        %v908 = vmul.f32 %v345, %v872
        %v909 = vmul.f32 %v346, %v874
        %v910 = vmul.f32 %v347, %v876
        %v911 = vmul.f32 %v348, %v862
        %v912 = vmul.f32 %v349, %v864
        %v913 = vmul.f32 %v350, %v866
        %v914 = vmul.f32 %v351, %v868
        %v915 = vmul.f32 %v352, %v870
        %v916 = vmul.f32 %v353, %v872
        %v917 = vmul.f32 %v354, %v874
        %v918 = vmul.f32 %v355, %v876
        %v919 = vmul.f32 %v356, %v862
        %v920 = vmul.f32 %v357, %v864
        %v921 = vmul.f32 %v358, %v866
        %v922 = vmul.f32 %v359, %v868
        %v923 = vmul.f32 %v360, %v870
        %v924 = vmul.f32 %v361, %v872
        %v925 = vmul.f32 %v362, %v874
        %v926 = vmul.f32 %v363, %v876
        %v927 = vmul.f32 %v364, %v862
        %v928 = vmul.f32 %v365, %v864
        %v929 = vmul.f32 %v366, %v866
        %v930 = vmul.f32 %v367, %v868
        %v931 = vmul.f32 %v368, %v870
        %v932 = vmul.f32 %v369, %v872
        %v933 = vmul.f32 %v370, %v874
        %v934 = vmul.f32 %v371, %v876
        %v935 = vmul.f32 %v372, %v862
        %v936 = vmul.f32 %v373, %v864
        %v937 = vmul.f32 %v374, %v866
        %v938 = vmul.f32 %v375, %v868
        %v939 = vmul.f32 %v376, %v870
        %v940 = vmul.f32 %v377, %v872
        %v941 = vmul.f32 %v378, %v874
        %v942 = vmul.f32 %v379, %v876
        %v943 = vmul.f32 %v380, %v862
        %v944 = vmul.f32 %v381, %v864
        %v945 = vmul.f32 %v382, %v866
        %v946 = vmul.f32 %v383, %v868
        %v947 = vmul.f32 %v384, %v870
        %v948 = vmul.f32 %v385, %v872
        %v949 = vmul.f32 %v386, %v874
        %v950 = vmul.f32 %v387, %v876
        %v951 = vmul.f32 %v388, %v862
        %v952 = vmul.f32 %v389, %v864
        %v953 = vmul.f32 %v390, %v866
        %v954 = vmul.f32 %v391, %v868
        %v955 = vmul.f32 %v392, %v870
        %v956 = vmul.f32 %v393, %v872
        %v957 = vmul.f32 %v394, %v874
        %v958 = vmul.f32 %v395, %v876
        %v959 = vmul.f32 %v396, %v862
        %v960 = vmul.f32 %v397, %v864
        %v961 = vmul.f32 %v398, %v866
        %v962 = vmul.f32 %v399, %v868
        %v963 = vmul.f32 %v400, %v870
        %v964 = vmul.f32 %v401, %v872
        %v965 = vmul.f32 %v402, %v874
        %v966 = vmul.f32 %v403, %v876
        %v967 = vmul.f32 %v404, %v862
        %v968 = vmul.f32 %v405, %v864
        %v969 = vmul.f32 %v406, %v866
        %v970 = vmul.f32 %v407, %v868
        %v971 = vmul.f32 %v408, %v870
        %v972 = vmul.f32 %v409, %v872
        %v973 = vmul.f32 %v410, %v874
        %v974 = vmul.f32 %v411, %v876
        %v975 = vmul.f32 %v412, %v862
        %v976 = vmul.f32 %v413, %v864
        %v977 = vmul.f32 %v414, %v866
        %v978 = vmul.f32 %v415, %v868
        %v979 = vmul.f32 %v416, %v870
        %v980 = vmul.f32 %v417, %v872
        %v981 = vmul.f32 %v418, %v874
        %v982 = vmul.f32 %v419, %v876
        %v983 = vmul.f32 %v420, %v862
        %v984 = vmul.f32 %v421, %v864
        %v985 = vmul.f32 %v422, %v866
        %v986 = vmul.f32 %v423, %v868
        %v987 = vmul.f32 %v424, %v870
        %v988 = vmul.f32 %v425, %v872
        %v989 = vmul.f32 %v426, %v874
        %v990 = vmul.f32 %v427, %v876
        %v991 = vmul.f32 %v428, %v862
        %v992 = vmul.f32 %v429, %v864
        %v993 = vmul.f32 %v430, %v866
        %v994 = vmul.f32 %v431, %v868
        %v995 = vmul.f32 %v432, %v870
        %v996 = vmul.f32 %v433, %v872
        %v997 = vmul.f32 %v434, %v874
        %v998 = vmul.f32 %v435, %v876
        %v999 = vmul.f32 %v436, %v862
        %v1000 = vmul.f32 %v437, %v864
        %v1001 = vmul.f32 %v438, %v866
        %v1002 = vmul.f32 %v439, %v868
        %v1003 = vmul.f32 %v440, %v870
        %v1004 = vmul.f32 %v441, %v872
        %v1005 = vmul.f32 %v442, %v874
        %v1006 = vmul.f32 %v443, %v876
        %v1007 = vmul.f32 %v444, %v862
        %v1008 = vmul.f32 %v445, %v864
        %v1009 = vmul.f32 %v446, %v866
        %v1010 = vmul.f32 %v447, %v868
        %v1011 = vmul.f32 %v448, %v870
        %v1012 = vmul.f32 %v449, %v872
        %v1013 = vmul.f32 %v450, %v874
        %v1014 = vmul.f32 %v451, %v876
        %v1015 = vadd.f32 %v887, %v888
        %v1016 = vadd.f32 %v1015, %v889
        %v1017 = vadd.f32 %v1016, %v890
        %v1018 = vadd.f32 %v1017, %v891
        %v1019 = vadd.f32 %v1018, %v892
        %v1020 = vadd.f32 %v1019, %v893
        %v1021 = vadd.f32 %v1020, %v894
        %1022 = vadd.xlane.f32.xlu0 %v1021
        %v1023 = vpop.xlane.xlu0 %1022
        %v1024 = vadd.f32 %v895, %v896
        %v1025 = vadd.f32 %v1024, %v897
        %v1026 = vadd.f32 %v1025, %v898
        %v1027 = vadd.f32 %v1026, %v899
        %v1028 = vadd.f32 %v1027, %v900
        %v1029 = vadd.f32 %v1028, %v901
        %v1030 = vadd.f32 %v1029, %v902
        %1031 = vadd.xlane.f32.xlu0 %v1030
        %v1032 = vpop.xlane.xlu0 %1031
        %v1033 = vadd.f32 %v903, %v904
        %v1034 = vadd.f32 %v1033, %v905
        %v1035 = vadd.f32 %v1034, %v906
        %v1036 = vadd.f32 %v1035, %v907
        %v1037 = vadd.f32 %v1036, %v908
        %v1038 = vadd.f32 %v1037, %v909
        %v1039 = vadd.f32 %v1038, %v910
        %1040 = vadd.xlane.f32.xlu0 %v1039
        %v1041 = vpop.xlane.xlu0 %1040
        %v1042 = vadd.f32 %v911, %v912
        %v1043 = vadd.f32 %v1042, %v913
        %v1044 = vadd.f32 %v1043, %v914
        %v1045 = vadd.f32 %v1044, %v915
        %v1046 = vadd.f32 %v1045, %v916
        %v1047 = vadd.f32 %v1046, %v917
        %v1048 = vadd.f32 %v1047, %v918
        %1049 = vadd.xlane.f32.xlu0 %v1048
        %v1050 = vpop.xlane.xlu0 %1049
        %v1051 = vadd.f32 %v919, %v920
        %v1052 = vadd.f32 %v1051, %v921
        %v1053 = vadd.f32 %v1052, %v922
        %v1054 = vadd.f32 %v1053, %v923
        %v1055 = vadd.f32 %v1054, %v924
        %v1056 = vadd.f32 %v1055, %v925
        %v1057 = vadd.f32 %v1056, %v926
        %1058 = vadd.xlane.f32.xlu0 %v1057
        %v1059 = vpop.xlane.xlu0 %1058
        %v1060 = vadd.f32 %v927, %v928
        %v1061 = vadd.f32 %v1060, %v929
        %v1062 = vadd.f32 %v1061, %v930
        %v1063 = vadd.f32 %v1062, %v931
        %v1064 = vadd.f32 %v1063, %v932
        %v1065 = vadd.f32 %v1064, %v933
        %v1066 = vadd.f32 %v1065, %v934
        %1067 = vadd.xlane.f32.xlu0 %v1066
        %v1068 = vpop.xlane.xlu0 %1067
        %v1069 = vadd.f32 %v935, %v936
        %v1070 = vadd.f32 %v1069, %v937
        %v1071 = vadd.f32 %v1070, %v938
        %v1072 = vadd.f32 %v1071, %v939
        %v1073 = vadd.f32 %v1072, %v940
        %v1074 = vadd.f32 %v1073, %v941
        %v1075 = vadd.f32 %v1074, %v942
        %1076 = vadd.xlane.f32.xlu0 %v1075
        %v1077 = vpop.xlane.xlu0 %1076
        %v1078 = vadd.f32 %v943, %v944
        %v1079 = vadd.f32 %v1078, %v945
        %v1080 = vadd.f32 %v1079, %v946
        %v1081 = vadd.f32 %v1080, %v947
        %v1082 = vadd.f32 %v1081, %v948
        %v1083 = vadd.f32 %v1082, %v949
        %v1084 = vadd.f32 %v1083, %v950
        %1085 = vadd.xlane.f32.xlu0 %v1084
        %v1086 = vpop.xlane.xlu0 %1085
        %v1087 = vadd.f32 %v951, %v952
        %v1088 = vadd.f32 %v1087, %v953
        %v1089 = vadd.f32 %v1088, %v954
        %v1090 = vadd.f32 %v1089, %v955
        %v1091 = vadd.f32 %v1090, %v956
        %v1092 = vadd.f32 %v1091, %v957
        %v1093 = vadd.f32 %v1092, %v958
        %1094 = vadd.xlane.f32.xlu0 %v1093
        %v1095 = vpop.xlane.xlu0 %1094
        %v1096 = vadd.f32 %v959, %v960
        %v1097 = vadd.f32 %v1096, %v961
        %v1098 = vadd.f32 %v1097, %v962
        %v1099 = vadd.f32 %v1098, %v963
        %v1100 = vadd.f32 %v1099, %v964
        %v1101 = vadd.f32 %v1100, %v965
        %v1102 = vadd.f32 %v1101, %v966
        %1103 = vadd.xlane.f32.xlu0 %v1102
        %v1104 = vpop.xlane.xlu0 %1103
        %v1105 = vadd.f32 %v967, %v968
        %v1106 = vadd.f32 %v1105, %v969
        %v1107 = vadd.f32 %v1106, %v970
        %v1108 = vadd.f32 %v1107, %v971
        %v1109 = vadd.f32 %v1108, %v972
        %v1110 = vadd.f32 %v1109, %v973
        %v1111 = vadd.f32 %v1110, %v974
        %1112 = vadd.xlane.f32.xlu0 %v1111
        %v1113 = vpop.xlane.xlu0 %1112
        %v1114 = vadd.f32 %v975, %v976
        %v1115 = vadd.f32 %v1114, %v977
        %v1116 = vadd.f32 %v1115, %v978
        %v1117 = vadd.f32 %v1116, %v979
        %v1118 = vadd.f32 %v1117, %v980
        %v1119 = vadd.f32 %v1118, %v981
        %v1120 = vadd.f32 %v1119, %v982
        %1121 = vadd.xlane.f32.xlu0 %v1120
        %v1122 = vpop.xlane.xlu0 %1121
        %v1123 = vadd.f32 %v983, %v984
        %v1124 = vadd.f32 %v1123, %v985
        %v1125 = vadd.f32 %v1124, %v986
        %v1126 = vadd.f32 %v1125, %v987
        %v1127 = vadd.f32 %v1126, %v988
        %v1128 = vadd.f32 %v1127, %v989
        %v1129 = vadd.f32 %v1128, %v990
        %1130 = vadd.xlane.f32.xlu0 %v1129
        %v1131 = vpop.xlane.xlu0 %1130
        %v1132 = vadd.f32 %v991, %v992
        %v1133 = vadd.f32 %v1132, %v993
        %v1134 = vadd.f32 %v1133, %v994
        %v1135 = vadd.f32 %v1134, %v995
        %v1136 = vadd.f32 %v1135, %v996
        %v1137 = vadd.f32 %v1136, %v997
        %v1138 = vadd.f32 %v1137, %v998
        %1139 = vadd.xlane.f32.xlu0 %v1138
        %v1140 = vpop.xlane.xlu0 %1139
        %v1141 = vadd.f32 %v999, %v1000
        %v1142 = vadd.f32 %v1141, %v1001
        %v1143 = vadd.f32 %v1142, %v1002
        %v1144 = vadd.f32 %v1143, %v1003
        %v1145 = vadd.f32 %v1144, %v1004
        %v1146 = vadd.f32 %v1145, %v1005
        %v1147 = vadd.f32 %v1146, %v1006
        %1148 = vadd.xlane.f32.xlu0 %v1147
        %v1149 = vpop.xlane.xlu0 %1148
        %v1150 = vadd.f32 %v1007, %v1008
        %v1151 = vadd.f32 %v1150, %v1009
        %v1152 = vadd.f32 %v1151, %v1010
        %v1153 = vadd.f32 %v1152, %v1011
        %v1154 = vadd.f32 %v1153, %v1012
        %v1155 = vadd.f32 %v1154, %v1013
        %v1156 = vadd.f32 %v1155, %v1014
        %1157 = vadd.xlane.f32.xlu0 %v1156
        %v1158 = vpop.xlane.xlu0 %1157
        %v1159 = vmul.f32 %v1023, %v886
        %v1160 = vmul.f32 %v1032, %v886
        %v1161 = vmul.f32 %v1041, %v886
        %v1162 = vmul.f32 %v1050, %v886
        %v1163 = vmul.f32 %v1059, %v886
        %v1164 = vmul.f32 %v1068, %v886
        %v1165 = vmul.f32 %v1077, %v886
        %v1166 = vmul.f32 %v1086, %v886
        %v1167 = vmul.f32 %v1095, %v886
        %v1168 = vmul.f32 %v1104, %v886
        %v1169 = vmul.f32 %v1113, %v886
        %v1170 = vmul.f32 %v1122, %v886
        %v1171 = vmul.f32 %v1131, %v886
        %v1172 = vmul.f32 %v1140, %v886
        %v1173 = vmul.f32 %v1149, %v886
        %v1174 = vmul.f32 %v1158, %v886
        %1175 = vxpose.xlu0.b32.start [1/16] %v1159, 128
        %1176 = vxpose.xlu0.b32.cont [2/16] %v1160, 128
        %1177 = vxpose.xlu0.b32.cont [3/16] %v1161, 128
        %1178 = vxpose.xlu0.b32.cont [4/16] %v1162, 128
        %1179 = vxpose.xlu0.b32.cont [5/16] %v1163, 128
        %1180 = vxpose.xlu0.b32.cont [6/16] %v1164, 128
        %1181 = vxpose.xlu0.b32.cont [7/16] %v1165, 128
        %1182 = vxpose.xlu0.b32.cont [8/16] %v1166, 128
        %1183 = vxpose.xlu0.b32.cont [9/16] %v1167, 128
        %1184 = vxpose.xlu0.b32.cont [10/16] %v1168, 128
        %1185 = vxpose.xlu0.b32.cont [11/16] %v1169, 128
        %1186 = vxpose.xlu0.b32.cont [12/16] %v1170, 128
        %1187 = vxpose.xlu0.b32.cont [13/16] %v1171, 128
        %1188 = vxpose.xlu0.b32.cont [14/16] %v1172, 128
        %1189 = vxpose.xlu0.b32.cont [15/16] %v1173, 128
        %1190 = vxpose.xlu0.b32.end [16/16] %v1174, 128
        %v1191 = vpop.trf.xlu0
        %v1192 = vpop.trf.xlu0
        %v1193 = vpop.trf.xlu0
        %v1194 = vpop.trf.xlu0
        %v1195 = vpop.trf.xlu0
        %v1196 = vpop.trf.xlu0
        %v1197 = vpop.trf.xlu0
        %v1198 = vpop.trf.xlu0
        %v1199 = vpop.trf.xlu0
        %v1200 = vpop.trf.xlu0
        %v1201 = vpop.trf.xlu0
        %v1202 = vpop.trf.xlu0
        %v1203 = vpop.trf.xlu0
        %v1204 = vpop.trf.xlu0
        %v1205 = vpop.trf.xlu0
        %v1206 = vpop.trf.xlu0
        %v1207 = vld [vmem:[%s2] sm:$0xff]
        %v1208 = vld [vmem:[%s2 + $0x8] sm:$0xff]
        %v1209 = vld [vmem:[%s2 + $0x10] sm:$0xff]
        %v1210 = vld [vmem:[%s2 + $0x18] sm:$0xff]
        %v1211 = vld [vmem:[%s2 + $0x20] sm:$0xff]
        %v1212 = vld [vmem:[%s2 + $0x28] sm:$0xff]
        %v1213 = vld [vmem:[%s2 + $0x30] sm:$0xff]
        %v1214 = vld [vmem:[%s2 + $0x38] sm:$0xff]
        %v1215 = vld [vmem:[%s2 + $0x40] sm:$0xff]
        %v1216 = vld [vmem:[%s2 + $0x48] sm:$0xff]
        %v1217 = vld [vmem:[%s2 + $0x50] sm:$0xff]
        %v1218 = vld [vmem:[%s2 + $0x58] sm:$0xff]
        %v1219 = vld [vmem:[%s2 + $0x60] sm:$0xff]
        %v1220 = vld [vmem:[%s2 + $0x68] sm:$0xff]
        %v1221 = vld [vmem:[%s2 + $0x70] sm:$0xff]
        %v1222 = vld [vmem:[%s2 + $0x78] sm:$0xff]
        %v1223 = vld [vmem:[%s3] sm:$0x1]
        %v1224 = vld [vmem:[%s4] sm:$0x1]
        %v1225 = vld [vmem:[%s5] sm:$0x1]
        %v1226 = vld [vmem:[%s6] sm:$0xff]
        %v1227 = vld [vmem:[%s7] sm:$0x1]
        %1228 = vmatprep.subr.mxu0 0.0
        %v1229 = vand.u32 %v1222, 4294901760
        %1230 = vmatpush1.msra.mxu0 %v1229
        %1231 = vmatprep.subr.mxu0 0.0
        %v1232 = vand.u32 %v1221, 4294901760
        %1233 = vmatpush1.msra.mxu0 %v1232
        %1234 = vmatprep.subr.mxu0 0.0
        %v1235 = vand.u32 %v1220, 4294901760
        %1236 = vmatpush1.msra.mxu0 %v1235
        %1237 = vmatprep.subr.mxu0 0.0
        %v1238 = vand.u32 %v1219, 4294901760
        %1239 = vmatpush1.msra.mxu0 %v1238
        %1240 = vmatprep.subr.mxu0 0.0
        %v1241 = vand.u32 %v1218, 4294901760
        %1242 = vmatpush1.msra.mxu0 %v1241
        %1243 = vmatprep.subr.mxu0 0.0
        %v1244 = vand.u32 %v1217, 4294901760
        %1245 = vmatpush1.msra.mxu0 %v1244
        %1246 = vmatprep.subr.mxu0 0.0
        %v1247 = vand.u32 %v1216, 4294901760
        %1248 = vmatpush1.msra.mxu0 %v1247
        %1249 = vmatprep.subr.mxu0 0.0
        %v1250 = vand.u32 %v1215, 4294901760
        %1251 = vmatpush1.msra.mxu0 %v1250
        %1252 = vmatprep.subr.mxu0 0.0
        %v1253 = vand.u32 %v1214, 4294901760
        %1254 = vmatpush1.msra.mxu0 %v1253
        %1255 = vmatprep.subr.mxu0 0.0
        %v1256 = vand.u32 %v1213, 4294901760
        %1257 = vmatpush1.msra.mxu0 %v1256
        %1258 = vmatprep.subr.mxu0 0.0
        %v1259 = vand.u32 %v1212, 4294901760
        %1260 = vmatpush1.msra.mxu0 %v1259
        %1261 = vmatprep.subr.mxu0 0.0
        %v1262 = vand.u32 %v1211, 4294901760
        %1263 = vmatpush1.msra.mxu0 %v1262
        %1264 = vmatprep.subr.mxu0 0.0
        %v1265 = vand.u32 %v1210, 4294901760
        %1266 = vmatpush1.msra.mxu0 %v1265
        %1267 = vmatprep.subr.mxu0 0.0
        %v1268 = vand.u32 %v1209, 4294901760
        %1269 = vmatpush1.msra.mxu0 %v1268
        %1270 = vmatprep.subr.mxu0 0.0
        %v1271 = vand.u32 %v1208, 4294901760
        %1272 = vmatpush1.msra.mxu0 %v1271
        %1273 = vmatprep.subr.mxu0 0.0
        %v1274 = vand.u32 %v1207, 4294901760
        %1275 = vmatpush1.msra.mxu0 %v1274
        %1276 = vmatprep.subr.mxu0 0.0
        %1277 = vmatpush2.msra.mxu0 0.0
        %1278 = vmatprep.subr.mxu0 0.0
        %1279 = vmatpush2.msra.mxu0 0.0
        %1280 = vmatprep.subr.mxu0 0.0
        %1281 = vmatpush2.msra.mxu0 0.0
        %1282 = vmatprep.subr.mxu0 0.0
        %1283 = vmatpush2.msra.mxu0 0.0
        %1284 = vmatprep.subr.mxu0 0.0
        %1285 = vmatpush2.msra.mxu0 0.0
        %1286 = vmatprep.subr.mxu0 0.0
        %1287 = vmatpush2.msra.mxu0 0.0
        %1288 = vmatprep.subr.mxu0 0.0
        %1289 = vmatpush2.msra.mxu0 0.0
        %1290 = vmatprep.subr.mxu0 0.0
        %1291 = vmatpush2.msra.mxu0 0.0
        %1292 = vmatprep.subr.mxu0 0.0
        %1293 = vmatpush2.msra.mxu0 0.0
        %1294 = vmatprep.subr.mxu0 0.0
        %1295 = vmatpush2.msra.mxu0 0.0
        %1296 = vmatprep.subr.mxu0 0.0
        %1297 = vmatpush2.msra.mxu0 0.0
        %1298 = vmatprep.subr.mxu0 0.0
        %1299 = vmatpush2.msra.mxu0 0.0
        %1300 = vmatprep.subr.mxu0 0.0
        %1301 = vmatpush2.msra.mxu0 0.0
        %1302 = vmatprep.subr.mxu0 0.0
        %1303 = vmatpush2.msra.mxu0 0.0
        %1304 = vmatprep.subr.mxu0 0.0
        %1305 = vmatpush2.msra.mxu0 0.0
        %1306 = vmatprep.subr.mxu0 0.0
        %1307 = vmatpush2.msra.mxu0 0.0
        %1308 = vmatprep.mubr.f32.mxu0 0.0
        %v1309 = vand.u32 %v1191, 4294901760
        %v1310 = vsub.f32 %v1191, %v1309
        %v1311 = vand.u32 %v1310, 4294901760
        %v1312 = vsub.f32 %v1310, %v1311
        %v1313 = vand.u32 %v1312, 4294901760
        %1314 = vmatmul.mubr.f32.gmra.mxu0 %v1313
        %v1315 = vpop.f32.mrf.mxu0
        %v1316 = vadd.f32 %v1223, %v1315
        %v1317 = vpop.f32.mrf.mxu0
        %1318 = vdwg.mxu0
        %1319 = vmatprep.subr.mxu0 0.0
        %v1320 = vand.u32 %v1222, 4294901760
        %v1321 = vsub.f32 %v1222, %v1320
        %v1322 = vand.u32 %v1321, 4294901760
        %v1323 = vsub.f32 %v1321, %v1322
        %v1324 = vand.u32 %v1323, 4294901760
        %1325 = vmatpush1.msra.mxu0 %v1324
        %1326 = vmatprep.subr.mxu0 0.0
        %v1327 = vand.u32 %v1221, 4294901760
        %v1328 = vsub.f32 %v1221, %v1327
        %v1329 = vand.u32 %v1328, 4294901760
        %v1330 = vsub.f32 %v1328, %v1329
        %v1331 = vand.u32 %v1330, 4294901760
        %1332 = vmatpush1.msra.mxu0 %v1331
        %1333 = vmatprep.subr.mxu0 0.0
        %v1334 = vand.u32 %v1220, 4294901760
        %v1335 = vsub.f32 %v1220, %v1334
        %v1336 = vand.u32 %v1335, 4294901760
        %v1337 = vsub.f32 %v1335, %v1336
        %v1338 = vand.u32 %v1337, 4294901760
        %1339 = vmatpush1.msra.mxu0 %v1338
        %1340 = vmatprep.subr.mxu0 0.0
        %v1341 = vand.u32 %v1219, 4294901760
        %v1342 = vsub.f32 %v1219, %v1341
        %v1343 = vand.u32 %v1342, 4294901760
        %v1344 = vsub.f32 %v1342, %v1343
        %v1345 = vand.u32 %v1344, 4294901760
        %1346 = vmatpush1.msra.mxu0 %v1345
        %1347 = vmatprep.subr.mxu0 0.0
        %v1348 = vand.u32 %v1218, 4294901760
        %v1349 = vsub.f32 %v1218, %v1348
        %v1350 = vand.u32 %v1349, 4294901760
        %v1351 = vsub.f32 %v1349, %v1350
        %v1352 = vand.u32 %v1351, 4294901760
        %1353 = vmatpush1.msra.mxu0 %v1352
        %1354 = vmatprep.subr.mxu0 0.0
        %v1355 = vand.u32 %v1217, 4294901760
        %v1356 = vsub.f32 %v1217, %v1355
        %v1357 = vand.u32 %v1356, 4294901760
        %v1358 = vsub.f32 %v1356, %v1357
        %v1359 = vand.u32 %v1358, 4294901760
        %1360 = vmatpush1.msra.mxu0 %v1359
        %1361 = vmatprep.subr.mxu0 0.0
        %v1362 = vand.u32 %v1216, 4294901760
        %v1363 = vsub.f32 %v1216, %v1362
        %v1364 = vand.u32 %v1363, 4294901760
        %v1365 = vsub.f32 %v1363, %v1364
        %v1366 = vand.u32 %v1365, 4294901760
        %1367 = vmatpush1.msra.mxu0 %v1366
        %1368 = vmatprep.subr.mxu0 0.0
        %v1369 = vand.u32 %v1215, 4294901760
        %v1370 = vsub.f32 %v1215, %v1369
        %v1371 = vand.u32 %v1370, 4294901760
        %v1372 = vsub.f32 %v1370, %v1371
        %v1373 = vand.u32 %v1372, 4294901760
        %1374 = vmatpush1.msra.mxu0 %v1373
        %1375 = vmatprep.subr.mxu0 0.0
        %v1376 = vand.u32 %v1214, 4294901760
        %v1377 = vsub.f32 %v1214, %v1376
        %v1378 = vand.u32 %v1377, 4294901760
        %v1379 = vsub.f32 %v1377, %v1378
        %v1380 = vand.u32 %v1379, 4294901760
        %1381 = vmatpush1.msra.mxu0 %v1380
        %1382 = vmatprep.subr.mxu0 0.0
        %v1383 = vand.u32 %v1213, 4294901760
        %v1384 = vsub.f32 %v1213, %v1383
        %v1385 = vand.u32 %v1384, 4294901760
        %v1386 = vsub.f32 %v1384, %v1385
        %v1387 = vand.u32 %v1386, 4294901760
        %1388 = vmatpush1.msra.mxu0 %v1387
        %1389 = vmatprep.subr.mxu0 0.0
        %v1390 = vand.u32 %v1212, 4294901760
        %v1391 = vsub.f32 %v1212, %v1390
        %v1392 = vand.u32 %v1391, 4294901760
        %v1393 = vsub.f32 %v1391, %v1392
        %v1394 = vand.u32 %v1393, 4294901760
        %1395 = vmatpush1.msra.mxu0 %v1394
        %1396 = vmatprep.subr.mxu0 0.0
        %v1397 = vand.u32 %v1211, 4294901760
        %v1398 = vsub.f32 %v1211, %v1397
        %v1399 = vand.u32 %v1398, 4294901760
        %v1400 = vsub.f32 %v1398, %v1399
        %v1401 = vand.u32 %v1400, 4294901760
        %1402 = vmatpush1.msra.mxu0 %v1401
        %1403 = vmatprep.subr.mxu0 0.0
        %v1404 = vand.u32 %v1210, 4294901760
        %v1405 = vsub.f32 %v1210, %v1404
        %v1406 = vand.u32 %v1405, 4294901760
        %v1407 = vsub.f32 %v1405, %v1406
        %v1408 = vand.u32 %v1407, 4294901760
        %1409 = vmatpush1.msra.mxu0 %v1408
        %1410 = vmatprep.subr.mxu0 0.0
        %v1411 = vand.u32 %v1209, 4294901760
        %v1412 = vsub.f32 %v1209, %v1411
        %v1413 = vand.u32 %v1412, 4294901760
        %v1414 = vsub.f32 %v1412, %v1413
        %v1415 = vand.u32 %v1414, 4294901760
        %1416 = vmatpush1.msra.mxu0 %v1415
        %1417 = vmatprep.subr.mxu0 0.0
        %v1418 = vand.u32 %v1208, 4294901760
        %v1419 = vsub.f32 %v1208, %v1418
        %v1420 = vand.u32 %v1419, 4294901760
        %v1421 = vsub.f32 %v1419, %v1420
        %v1422 = vand.u32 %v1421, 4294901760
        %1423 = vmatpush1.msra.mxu0 %v1422
        %1424 = vmatprep.subr.mxu0 0.0
        %v1425 = vand.u32 %v1207, 4294901760
        %v1426 = vsub.f32 %v1207, %v1425
        %v1427 = vand.u32 %v1426, 4294901760
        %v1428 = vsub.f32 %v1426, %v1427
        %v1429 = vand.u32 %v1428, 4294901760
        %1430 = vmatpush1.msra.mxu0 %v1429
        %1431 = vmatprep.subr.mxu0 0.0
        %1432 = vmatpush2.msra.mxu0 0.0
        %1433 = vmatprep.subr.mxu0 0.0
        %1434 = vmatpush2.msra.mxu0 0.0
        %1435 = vmatprep.subr.mxu0 0.0
        %1436 = vmatpush2.msra.mxu0 0.0
        %1437 = vmatprep.subr.mxu0 0.0
        %1438 = vmatpush2.msra.mxu0 0.0
        %1439 = vmatprep.subr.mxu0 0.0
        %1440 = vmatpush2.msra.mxu0 0.0
        %1441 = vmatprep.subr.mxu0 0.0
        %1442 = vmatpush2.msra.mxu0 0.0
        %1443 = vmatprep.subr.mxu0 0.0
        %1444 = vmatpush2.msra.mxu0 0.0
        %1445 = vmatprep.subr.mxu0 0.0
        %1446 = vmatpush2.msra.mxu0 0.0
        %1447 = vmatprep.subr.mxu0 0.0
        %1448 = vmatpush2.msra.mxu0 0.0
        %1449 = vmatprep.subr.mxu0 0.0
        %1450 = vmatpush2.msra.mxu0 0.0
        %1451 = vmatprep.subr.mxu0 0.0
        %1452 = vmatpush2.msra.mxu0 0.0
        %1453 = vmatprep.subr.mxu0 0.0
        %1454 = vmatpush2.msra.mxu0 0.0
        %1455 = vmatprep.subr.mxu0 0.0
        %1456 = vmatpush2.msra.mxu0 0.0
        %1457 = vmatprep.subr.mxu0 0.0
        %1458 = vmatpush2.msra.mxu0 0.0
        %1459 = vmatprep.subr.mxu0 0.0
        %1460 = vmatpush2.msra.mxu0 0.0
        %1461 = vmatprep.subr.mxu0 0.0
        %1462 = vmatpush2.msra.mxu0 0.0
        %1463 = vmatprep.mubr.f32.mxu0 0.0
        %v1464 = vand.u32 %v1191, 4294901760
        %1465 = vmatmul.mubr.f32.gmra.mxu0 %v1464
        %v1466 = vpop.f32.mrf.mxu0
        %v1467 = vadd.f32 %v1316, %v1466
        %v1468 = vpop.f32.mrf.mxu0
        %1469 = vdwg.mxu0
        %1470 = vmatprep.subr.mxu0 0.0
        %v1471 = vand.u32 %v1222, 4294901760
        %v1472 = vsub.f32 %v1222, %v1471
        %1473 = vmatpush1.msra.mxu0 %v1472
        %1474 = vmatprep.subr.mxu0 0.0
        %v1475 = vand.u32 %v1221, 4294901760
        %v1476 = vsub.f32 %v1221, %v1475
        %1477 = vmatpush1.msra.mxu0 %v1476
        %1478 = vmatprep.subr.mxu0 0.0
        %v1479 = vand.u32 %v1220, 4294901760
        %v1480 = vsub.f32 %v1220, %v1479
        %1481 = vmatpush1.msra.mxu0 %v1480
        %1482 = vmatprep.subr.mxu0 0.0
        %v1483 = vand.u32 %v1219, 4294901760
        %v1484 = vsub.f32 %v1219, %v1483
        %1485 = vmatpush1.msra.mxu0 %v1484
        %1486 = vmatprep.subr.mxu0 0.0
        %v1487 = vand.u32 %v1218, 4294901760
        %v1488 = vsub.f32 %v1218, %v1487
        %1489 = vmatpush1.msra.mxu0 %v1488
        %1490 = vmatprep.subr.mxu0 0.0
        %v1491 = vand.u32 %v1217, 4294901760
        %v1492 = vsub.f32 %v1217, %v1491
        %1493 = vmatpush1.msra.mxu0 %v1492
        %1494 = vmatprep.subr.mxu0 0.0
        %v1495 = vand.u32 %v1216, 4294901760
        %v1496 = vsub.f32 %v1216, %v1495
        %1497 = vmatpush1.msra.mxu0 %v1496
        %1498 = vmatprep.subr.mxu0 0.0
        %v1499 = vand.u32 %v1215, 4294901760
        %v1500 = vsub.f32 %v1215, %v1499
        %1501 = vmatpush1.msra.mxu0 %v1500
        %1502 = vmatprep.subr.mxu0 0.0
        %v1503 = vand.u32 %v1214, 4294901760
        %v1504 = vsub.f32 %v1214, %v1503
        %1505 = vmatpush1.msra.mxu0 %v1504
        %1506 = vmatprep.subr.mxu0 0.0
        %v1507 = vand.u32 %v1213, 4294901760
        %v1508 = vsub.f32 %v1213, %v1507
        %1509 = vmatpush1.msra.mxu0 %v1508
        %1510 = vmatprep.subr.mxu0 0.0
        %v1511 = vand.u32 %v1212, 4294901760
        %v1512 = vsub.f32 %v1212, %v1511
        %1513 = vmatpush1.msra.mxu0 %v1512
        %1514 = vmatprep.subr.mxu0 0.0
        %v1515 = vand.u32 %v1211, 4294901760
        %v1516 = vsub.f32 %v1211, %v1515
        %1517 = vmatpush1.msra.mxu0 %v1516
        %1518 = vmatprep.subr.mxu0 0.0
        %v1519 = vand.u32 %v1210, 4294901760
        %v1520 = vsub.f32 %v1210, %v1519
        %1521 = vmatpush1.msra.mxu0 %v1520
        %1522 = vmatprep.subr.mxu0 0.0
        %v1523 = vand.u32 %v1209, 4294901760
        %v1524 = vsub.f32 %v1209, %v1523
        %1525 = vmatpush1.msra.mxu0 %v1524
        %1526 = vmatprep.subr.mxu0 0.0
        %v1527 = vand.u32 %v1208, 4294901760
        %v1528 = vsub.f32 %v1208, %v1527
        %1529 = vmatpush1.msra.mxu0 %v1528
        %1530 = vmatprep.subr.mxu0 0.0
        %v1531 = vand.u32 %v1207, 4294901760
        %v1532 = vsub.f32 %v1207, %v1531
        %1533 = vmatpush1.msra.mxu0 %v1532
        %1534 = vmatprep.subr.mxu0 0.0
        %1535 = vmatpush2.msra.mxu0 0.0
        %1536 = vmatprep.subr.mxu0 0.0
        %1537 = vmatpush2.msra.mxu0 0.0
        %1538 = vmatprep.subr.mxu0 0.0
        %1539 = vmatpush2.msra.mxu0 0.0
        %1540 = vmatprep.subr.mxu0 0.0
        %1541 = vmatpush2.msra.mxu0 0.0
        %1542 = vmatprep.subr.mxu0 0.0
        %1543 = vmatpush2.msra.mxu0 0.0
        %1544 = vmatprep.subr.mxu0 0.0
        %1545 = vmatpush2.msra.mxu0 0.0
        %1546 = vmatprep.subr.mxu0 0.0
        %1547 = vmatpush2.msra.mxu0 0.0
        %1548 = vmatprep.subr.mxu0 0.0
        %1549 = vmatpush2.msra.mxu0 0.0
        %1550 = vmatprep.subr.mxu0 0.0
        %1551 = vmatpush2.msra.mxu0 0.0
        %1552 = vmatprep.subr.mxu0 0.0
        %1553 = vmatpush2.msra.mxu0 0.0
        %1554 = vmatprep.subr.mxu0 0.0
        %1555 = vmatpush2.msra.mxu0 0.0
        %1556 = vmatprep.subr.mxu0 0.0
        %1557 = vmatpush2.msra.mxu0 0.0
        %1558 = vmatprep.subr.mxu0 0.0
        %1559 = vmatpush2.msra.mxu0 0.0
        %1560 = vmatprep.subr.mxu0 0.0
        %1561 = vmatpush2.msra.mxu0 0.0
        %1562 = vmatprep.subr.mxu0 0.0
        %1563 = vmatpush2.msra.mxu0 0.0
        %1564 = vmatprep.subr.mxu0 0.0
        %1565 = vmatpush2.msra.mxu0 0.0
        %1566 = vmatprep.mubr.f32.mxu0 0.0
        %v1567 = vand.u32 %v1191, 4294901760
        %v1568 = vsub.f32 %v1191, %v1567
        %1569 = vmatmul.mubr.f32.gmra.mxu0 %v1568
        %v1570 = vpop.f32.mrf.mxu0
        %v1571 = vadd.f32 %v1467, %v1570
        %v1572 = vpop.f32.mrf.mxu0
        %1573 = vdwg.mxu0
        %1574 = vmatprep.subr.mxu0 0.0
        %v1575 = vand.u32 %v1222, 4294901760
        %1576 = vmatpush1.msra.mxu0 %v1575
        %1577 = vmatprep.subr.mxu0 0.0
        %v1578 = vand.u32 %v1221, 4294901760
        %1579 = vmatpush1.msra.mxu0 %v1578
        %1580 = vmatprep.subr.mxu0 0.0
        %v1581 = vand.u32 %v1220, 4294901760
        %1582 = vmatpush1.msra.mxu0 %v1581
        %1583 = vmatprep.subr.mxu0 0.0
        %v1584 = vand.u32 %v1219, 4294901760
        %1585 = vmatpush1.msra.mxu0 %v1584
        %1586 = vmatprep.subr.mxu0 0.0
        %v1587 = vand.u32 %v1218, 4294901760
        %1588 = vmatpush1.msra.mxu0 %v1587
        %1589 = vmatprep.subr.mxu0 0.0
        %v1590 = vand.u32 %v1217, 4294901760
        %1591 = vmatpush1.msra.mxu0 %v1590
        %1592 = vmatprep.subr.mxu0 0.0
        %v1593 = vand.u32 %v1216, 4294901760
        %1594 = vmatpush1.msra.mxu0 %v1593
        %1595 = vmatprep.subr.mxu0 0.0
        %v1596 = vand.u32 %v1215, 4294901760
        %1597 = vmatpush1.msra.mxu0 %v1596
        %1598 = vmatprep.subr.mxu0 0.0
        %v1599 = vand.u32 %v1214, 4294901760
        %1600 = vmatpush1.msra.mxu0 %v1599
        %1601 = vmatprep.subr.mxu0 0.0
        %v1602 = vand.u32 %v1213, 4294901760
        %1603 = vmatpush1.msra.mxu0 %v1602
        %1604 = vmatprep.subr.mxu0 0.0
        %v1605 = vand.u32 %v1212, 4294901760
        %1606 = vmatpush1.msra.mxu0 %v1605
        %1607 = vmatprep.subr.mxu0 0.0
        %v1608 = vand.u32 %v1211, 4294901760
        %1609 = vmatpush1.msra.mxu0 %v1608
        %1610 = vmatprep.subr.mxu0 0.0
        %v1611 = vand.u32 %v1210, 4294901760
        %1612 = vmatpush1.msra.mxu0 %v1611
        %1613 = vmatprep.subr.mxu0 0.0
        %v1614 = vand.u32 %v1209, 4294901760
        %1615 = vmatpush1.msra.mxu0 %v1614
        %1616 = vmatprep.subr.mxu0 0.0
        %v1617 = vand.u32 %v1208, 4294901760
        %1618 = vmatpush1.msra.mxu0 %v1617
        %1619 = vmatprep.subr.mxu0 0.0
        %v1620 = vand.u32 %v1207, 4294901760
        %1621 = vmatpush1.msra.mxu0 %v1620
        %1622 = vmatprep.subr.mxu0 0.0
        %1623 = vmatpush2.msra.mxu0 0.0
        %1624 = vmatprep.subr.mxu0 0.0
        %1625 = vmatpush2.msra.mxu0 0.0
        %1626 = vmatprep.subr.mxu0 0.0
        %1627 = vmatpush2.msra.mxu0 0.0
        %1628 = vmatprep.subr.mxu0 0.0
        %1629 = vmatpush2.msra.mxu0 0.0
        %1630 = vmatprep.subr.mxu0 0.0
        %1631 = vmatpush2.msra.mxu0 0.0
        %1632 = vmatprep.subr.mxu0 0.0
        %1633 = vmatpush2.msra.mxu0 0.0
        %1634 = vmatprep.subr.mxu0 0.0
        %1635 = vmatpush2.msra.mxu0 0.0
        %1636 = vmatprep.subr.mxu0 0.0
        %1637 = vmatpush2.msra.mxu0 0.0
        %1638 = vmatprep.subr.mxu0 0.0
        %1639 = vmatpush2.msra.mxu0 0.0
        %1640 = vmatprep.subr.mxu0 0.0
        %1641 = vmatpush2.msra.mxu0 0.0
        %1642 = vmatprep.subr.mxu0 0.0
        %1643 = vmatpush2.msra.mxu0 0.0
        %1644 = vmatprep.subr.mxu0 0.0
        %1645 = vmatpush2.msra.mxu0 0.0
        %1646 = vmatprep.subr.mxu0 0.0
        %1647 = vmatpush2.msra.mxu0 0.0
        %1648 = vmatprep.subr.mxu0 0.0
        %1649 = vmatpush2.msra.mxu0 0.0
        %1650 = vmatprep.subr.mxu0 0.0
        %1651 = vmatpush2.msra.mxu0 0.0
        %1652 = vmatprep.subr.mxu0 0.0
        %1653 = vmatpush2.msra.mxu0 0.0
        %1654 = vmatprep.mubr.f32.mxu0 0.0
        %v1655 = vand.u32 %v1191, 4294901760
        %v1656 = vsub.f32 %v1191, %v1655
        %v1657 = vand.u32 %v1656, 4294901760
        %1658 = vmatmul.mubr.f32.gmra.mxu0 %v1657
        %v1659 = vpop.f32.mrf.mxu0
        %v1660 = vadd.f32 %v1571, %v1659
        %v1661 = vpop.f32.mrf.mxu0
        %1662 = vdwg.mxu0
        %1663 = vmatprep.subr.mxu0 0.0
        %v1664 = vand.u32 %v1222, 4294901760
        %v1665 = vsub.f32 %v1222, %v1664
        %v1666 = vand.u32 %v1665, 4294901760
        %1667 = vmatpush1.msra.mxu0 %v1666
        %1668 = vmatprep.subr.mxu0 0.0
        %v1669 = vand.u32 %v1221, 4294901760
        %v1670 = vsub.f32 %v1221, %v1669
        %v1671 = vand.u32 %v1670, 4294901760
        %1672 = vmatpush1.msra.mxu0 %v1671
        %1673 = vmatprep.subr.mxu0 0.0
        %v1674 = vand.u32 %v1220, 4294901760
        %v1675 = vsub.f32 %v1220, %v1674
        %v1676 = vand.u32 %v1675, 4294901760
        %1677 = vmatpush1.msra.mxu0 %v1676
        %1678 = vmatprep.subr.mxu0 0.0
        %v1679 = vand.u32 %v1219, 4294901760
        %v1680 = vsub.f32 %v1219, %v1679
        %v1681 = vand.u32 %v1680, 4294901760
        %1682 = vmatpush1.msra.mxu0 %v1681
        %1683 = vmatprep.subr.mxu0 0.0
        %v1684 = vand.u32 %v1218, 4294901760
        %v1685 = vsub.f32 %v1218, %v1684
        %v1686 = vand.u32 %v1685, 4294901760
        %1687 = vmatpush1.msra.mxu0 %v1686
        %1688 = vmatprep.subr.mxu0 0.0
        %v1689 = vand.u32 %v1217, 4294901760
        %v1690 = vsub.f32 %v1217, %v1689
        %v1691 = vand.u32 %v1690, 4294901760
        %1692 = vmatpush1.msra.mxu0 %v1691
        %1693 = vmatprep.subr.mxu0 0.0
        %v1694 = vand.u32 %v1216, 4294901760
        %v1695 = vsub.f32 %v1216, %v1694
        %v1696 = vand.u32 %v1695, 4294901760
        %1697 = vmatpush1.msra.mxu0 %v1696
        %1698 = vmatprep.subr.mxu0 0.0
        %v1699 = vand.u32 %v1215, 4294901760
        %v1700 = vsub.f32 %v1215, %v1699
        %v1701 = vand.u32 %v1700, 4294901760
        %1702 = vmatpush1.msra.mxu0 %v1701
        %1703 = vmatprep.subr.mxu0 0.0
        %v1704 = vand.u32 %v1214, 4294901760
        %v1705 = vsub.f32 %v1214, %v1704
        %v1706 = vand.u32 %v1705, 4294901760
        %1707 = vmatpush1.msra.mxu0 %v1706
        %1708 = vmatprep.subr.mxu0 0.0
        %v1709 = vand.u32 %v1213, 4294901760
        %v1710 = vsub.f32 %v1213, %v1709
        %v1711 = vand.u32 %v1710, 4294901760
        %1712 = vmatpush1.msra.mxu0 %v1711
        %1713 = vmatprep.subr.mxu0 0.0
        %v1714 = vand.u32 %v1212, 4294901760
        %v1715 = vsub.f32 %v1212, %v1714
        %v1716 = vand.u32 %v1715, 4294901760
        %1717 = vmatpush1.msra.mxu0 %v1716
        %1718 = vmatprep.subr.mxu0 0.0
        %v1719 = vand.u32 %v1211, 4294901760
        %v1720 = vsub.f32 %v1211, %v1719
        %v1721 = vand.u32 %v1720, 4294901760
        %1722 = vmatpush1.msra.mxu0 %v1721
        %1723 = vmatprep.subr.mxu0 0.0
        %v1724 = vand.u32 %v1210, 4294901760
        %v1725 = vsub.f32 %v1210, %v1724
        %v1726 = vand.u32 %v1725, 4294901760
        %1727 = vmatpush1.msra.mxu0 %v1726
        %1728 = vmatprep.subr.mxu0 0.0
        %v1729 = vand.u32 %v1209, 4294901760
        %v1730 = vsub.f32 %v1209, %v1729
        %v1731 = vand.u32 %v1730, 4294901760
        %1732 = vmatpush1.msra.mxu0 %v1731
        %1733 = vmatprep.subr.mxu0 0.0
        %v1734 = vand.u32 %v1208, 4294901760
        %v1735 = vsub.f32 %v1208, %v1734
        %v1736 = vand.u32 %v1735, 4294901760
        %1737 = vmatpush1.msra.mxu0 %v1736
        %1738 = vmatprep.subr.mxu0 0.0
        %v1739 = vand.u32 %v1207, 4294901760
        %v1740 = vsub.f32 %v1207, %v1739
        %v1741 = vand.u32 %v1740, 4294901760
        %1742 = vmatpush1.msra.mxu0 %v1741
        %1743 = vmatprep.subr.mxu0 0.0
        %1744 = vmatpush2.msra.mxu0 0.0
        %1745 = vmatprep.subr.mxu0 0.0
        %1746 = vmatpush2.msra.mxu0 0.0
        %1747 = vmatprep.subr.mxu0 0.0
        %1748 = vmatpush2.msra.mxu0 0.0
        %1749 = vmatprep.subr.mxu0 0.0
        %1750 = vmatpush2.msra.mxu0 0.0
        %1751 = vmatprep.subr.mxu0 0.0
        %1752 = vmatpush2.msra.mxu0 0.0
        %1753 = vmatprep.subr.mxu0 0.0
        %1754 = vmatpush2.msra.mxu0 0.0
        %1755 = vmatprep.subr.mxu0 0.0
        %1756 = vmatpush2.msra.mxu0 0.0
        %1757 = vmatprep.subr.mxu0 0.0
        %1758 = vmatpush2.msra.mxu0 0.0
        %1759 = vmatprep.subr.mxu0 0.0
        %1760 = vmatpush2.msra.mxu0 0.0
        %1761 = vmatprep.subr.mxu0 0.0
        %1762 = vmatpush2.msra.mxu0 0.0
        %1763 = vmatprep.subr.mxu0 0.0
        %1764 = vmatpush2.msra.mxu0 0.0
        %1765 = vmatprep.subr.mxu0 0.0
        %1766 = vmatpush2.msra.mxu0 0.0
        %1767 = vmatprep.subr.mxu0 0.0
        %1768 = vmatpush2.msra.mxu0 0.0
        %1769 = vmatprep.subr.mxu0 0.0
        %1770 = vmatpush2.msra.mxu0 0.0
        %1771 = vmatprep.subr.mxu0 0.0
        %1772 = vmatpush2.msra.mxu0 0.0
        %1773 = vmatprep.subr.mxu0 0.0
        %1774 = vmatpush2.msra.mxu0 0.0
        %1775 = vmatprep.mubr.f32.mxu0 0.0
        %v1776 = vand.u32 %v1191, 4294901760
        %1777 = vmatmul.mubr.f32.gmra.mxu0 %v1776
        %v1778 = vpop.f32.mrf.mxu0
        %v1779 = vadd.f32 %v1660, %v1778
        %v1780 = vpop.f32.mrf.mxu0
        %1781 = vdwg.mxu0
        %1782 = vmatprep.subr.mxu0 0.0
        %v1783 = vand.u32 %v1222, 4294901760
        %1784 = vmatpush1.msra.mxu0 %v1783
        %1785 = vmatprep.subr.mxu0 0.0
        %v1786 = vand.u32 %v1221, 4294901760
        %1787 = vmatpush1.msra.mxu0 %v1786
        %1788 = vmatprep.subr.mxu0 0.0
        %v1789 = vand.u32 %v1220, 4294901760
        %1790 = vmatpush1.msra.mxu0 %v1789
        %1791 = vmatprep.subr.mxu0 0.0
        %v1792 = vand.u32 %v1219, 4294901760
        %1793 = vmatpush1.msra.mxu0 %v1792
        %1794 = vmatprep.subr.mxu0 0.0
        %v1795 = vand.u32 %v1218, 4294901760
        %1796 = vmatpush1.msra.mxu0 %v1795
        %1797 = vmatprep.subr.mxu0 0.0
        %v1798 = vand.u32 %v1217, 4294901760
        %1799 = vmatpush1.msra.mxu0 %v1798
        %1800 = vmatprep.subr.mxu0 0.0
        %v1801 = vand.u32 %v1216, 4294901760
        %1802 = vmatpush1.msra.mxu0 %v1801
        %1803 = vmatprep.subr.mxu0 0.0
        %v1804 = vand.u32 %v1215, 4294901760
        %1805 = vmatpush1.msra.mxu0 %v1804
        %1806 = vmatprep.subr.mxu0 0.0
        %v1807 = vand.u32 %v1214, 4294901760
        %1808 = vmatpush1.msra.mxu0 %v1807
        %1809 = vmatprep.subr.mxu0 0.0
        %v1810 = vand.u32 %v1213, 4294901760
        %1811 = vmatpush1.msra.mxu0 %v1810
        %1812 = vmatprep.subr.mxu0 0.0
        %v1813 = vand.u32 %v1212, 4294901760
        %1814 = vmatpush1.msra.mxu0 %v1813
        %1815 = vmatprep.subr.mxu0 0.0
        %v1816 = vand.u32 %v1211, 4294901760
        %1817 = vmatpush1.msra.mxu0 %v1816
        %1818 = vmatprep.subr.mxu0 0.0
        %v1819 = vand.u32 %v1210, 4294901760
        %1820 = vmatpush1.msra.mxu0 %v1819
        %1821 = vmatprep.subr.mxu0 0.0
        %v1822 = vand.u32 %v1209, 4294901760
        %1823 = vmatpush1.msra.mxu0 %v1822
        %1824 = vmatprep.subr.mxu0 0.0
        %v1825 = vand.u32 %v1208, 4294901760
        %1826 = vmatpush1.msra.mxu0 %v1825
        %1827 = vmatprep.subr.mxu0 0.0
        %v1828 = vand.u32 %v1207, 4294901760
        %1829 = vmatpush1.msra.mxu0 %v1828
        %1830 = vmatprep.subr.mxu0 0.0
        %1831 = vmatpush2.msra.mxu0 0.0
        %1832 = vmatprep.subr.mxu0 0.0
        %1833 = vmatpush2.msra.mxu0 0.0
        %1834 = vmatprep.subr.mxu0 0.0
        %1835 = vmatpush2.msra.mxu0 0.0
        %1836 = vmatprep.subr.mxu0 0.0
        %1837 = vmatpush2.msra.mxu0 0.0
        %1838 = vmatprep.subr.mxu0 0.0
        %1839 = vmatpush2.msra.mxu0 0.0
        %1840 = vmatprep.subr.mxu0 0.0
        %1841 = vmatpush2.msra.mxu0 0.0
        %1842 = vmatprep.subr.mxu0 0.0
        %1843 = vmatpush2.msra.mxu0 0.0
        %1844 = vmatprep.subr.mxu0 0.0
        %1845 = vmatpush2.msra.mxu0 0.0
        %1846 = vmatprep.subr.mxu0 0.0
        %1847 = vmatpush2.msra.mxu0 0.0
        %1848 = vmatprep.subr.mxu0 0.0
        %1849 = vmatpush2.msra.mxu0 0.0
        %1850 = vmatprep.subr.mxu0 0.0
        %1851 = vmatpush2.msra.mxu0 0.0
        %1852 = vmatprep.subr.mxu0 0.0
        %1853 = vmatpush2.msra.mxu0 0.0
        %1854 = vmatprep.subr.mxu0 0.0
        %1855 = vmatpush2.msra.mxu0 0.0
        %1856 = vmatprep.subr.mxu0 0.0
        %1857 = vmatpush2.msra.mxu0 0.0
        %1858 = vmatprep.subr.mxu0 0.0
        %1859 = vmatpush2.msra.mxu0 0.0
        %1860 = vmatprep.subr.mxu0 0.0
        %1861 = vmatpush2.msra.mxu0 0.0
        %1862 = vmatprep.mubr.f32.mxu0 0.0
        %v1863 = vand.u32 %v1191, 4294901760
        %1864 = vmatmul.mubr.f32.gmra.mxu0 %v1863
        %v1865 = vpop.f32.mrf.mxu0
        %v1866 = vadd.f32 %v1779, %v1865
        %v1867 = vpop.f32.mrf.mxu0
        %1868 = vdwg.mxu0
        %vm1869 = vcmask 57344
        %v1870 = vsel %vm1869, %v1866, 0.0
        %1871 = vadd.xlane.f32.xlu0 %v1870
        %v1872 = vpop.xlane.xlu0 %1871
        %v1873 = vrcp.pop 8.0
        %v1874 = vmul.f32 %v1872, %v1873
        %v1875 = vsub.f32 %v1866, %v1874
        %v1876 = vmul.f32 %v1875, %v1875
        %v1877 = vsel %vm1869, %v1876, 0.0
        %1878 = vadd.xlane.f32.xlu0 %v1877
        %v1879 = vpop.xlane.xlu0 %1878
        %v1880 = vmul.f32 %v1879, %v1873
        %v1881 = vadd.f32 %v1880, 1e-05
        %v1882 = vrsqrt.pop %v1881
        %v1883 = vmul.f32 %v1875, %v1882
        %v1884 = vmul.f32 %v1883, %v1224
        %v1885 = vadd.f32 %v1884, %v1225
        %v1886 = vmax.f32 %v1885, 0.0
        %vm1887 = vcmask 64512
        %v1889 = vsel %vm1887, %v1886, 0
        %1891 = vmatprep.subr.mxu0 0.0
        %1892 = vmatpush1.msra.mxu0 0.0
        %1893 = vmatprep.subr.mxu0 0.0
        %1894 = vmatpush1.msra.mxu0 0.0
        %1895 = vmatprep.subr.mxu0 0.0
        %1896 = vmatpush1.msra.mxu0 0.0
        %1897 = vmatprep.subr.mxu0 0.0
        %1898 = vmatpush1.msra.mxu0 0.0
        %1899 = vmatprep.subr.mxu0 0.0
        %1900 = vmatpush1.msra.mxu0 0.0
        %1901 = vmatprep.subr.mxu0 0.0
        %1902 = vmatpush1.msra.mxu0 0.0
        %1903 = vmatprep.subr.mxu0 0.0
        %1904 = vmatpush1.msra.mxu0 0.0
        %1905 = vmatprep.subr.mxu0 0.0
        %1906 = vmatpush1.msra.mxu0 0.0
        %1907 = vmatprep.subr.mxu0 0.0
        %1908 = vmatpush1.msra.mxu0 0.0
        %1909 = vmatprep.subr.mxu0 0.0
        %1910 = vmatpush1.msra.mxu0 0.0
        %1911 = vmatprep.subr.mxu0 0.0
        %1912 = vmatpush1.msra.mxu0 0.0
        %1913 = vmatprep.subr.mxu0 0.0
        %1914 = vmatpush1.msra.mxu0 0.0
        %1915 = vmatprep.subr.mxu0 0.0
        %1916 = vmatpush1.msra.mxu0 0.0
        %1917 = vmatprep.subr.mxu0 0.0
        %1918 = vmatpush1.msra.mxu0 0.0
        %1919 = vmatprep.subr.mxu0 0.0
        %1920 = vmatpush1.msra.mxu0 0.0
        %1921 = vmatprep.subr.mxu0 0.0
        %v1922 = vand.u32 %v1226, 4294901760
        %1923 = vmatpush1.msra.mxu0 %v1922
        %1924 = vmatprep.subr.mxu0 0.0
        %1925 = vmatpush2.msra.mxu0 0.0
        %1926 = vmatprep.subr.mxu0 0.0
        %1927 = vmatpush2.msra.mxu0 0.0
        %1928 = vmatprep.subr.mxu0 0.0
        %1929 = vmatpush2.msra.mxu0 0.0
        %1930 = vmatprep.subr.mxu0 0.0
        %1931 = vmatpush2.msra.mxu0 0.0
        %1932 = vmatprep.subr.mxu0 0.0
        %1933 = vmatpush2.msra.mxu0 0.0
        %1934 = vmatprep.subr.mxu0 0.0
        %1935 = vmatpush2.msra.mxu0 0.0
        %1936 = vmatprep.subr.mxu0 0.0
        %1937 = vmatpush2.msra.mxu0 0.0
        %1938 = vmatprep.subr.mxu0 0.0
        %1939 = vmatpush2.msra.mxu0 0.0
        %1940 = vmatprep.subr.mxu0 0.0
        %1941 = vmatpush2.msra.mxu0 0.0
        %1942 = vmatprep.subr.mxu0 0.0
        %1943 = vmatpush2.msra.mxu0 0.0
        %1944 = vmatprep.subr.mxu0 0.0
        %1945 = vmatpush2.msra.mxu0 0.0
        %1946 = vmatprep.subr.mxu0 0.0
        %1947 = vmatpush2.msra.mxu0 0.0
        %1948 = vmatprep.subr.mxu0 0.0
        %1949 = vmatpush2.msra.mxu0 0.0
        %1950 = vmatprep.subr.mxu0 0.0
        %1951 = vmatpush2.msra.mxu0 0.0
        %1952 = vmatprep.subr.mxu0 0.0
        %1953 = vmatpush2.msra.mxu0 0.0
        %1954 = vmatprep.subr.mxu0 0.0
        %1955 = vmatpush2.msra.mxu0 0.0
        %1956 = vmatprep.mubr.f32.mxu0 0.0
        %v1957 = vand.u32 %v1889, 4294901760
        %v1958 = vsub.f32 %v1889, %v1957
        %v1959 = vand.u32 %v1958, 4294901760
        %v1960 = vsub.f32 %v1958, %v1959
        %v1961 = vand.u32 %v1960, 4294901760
        %1962 = vmatmul.mubr.f32.gmra.mxu0 %v1961
        %v1963 = vpop.f32.mrf.mxu0
        %v1964 = vadd.f32 %v1227, %v1963
        %v1965 = vpop.f32.mrf.mxu0
        %1966 = vdwg.mxu0
        %1967 = vmatprep.subr.mxu0 0.0
        %1968 = vmatpush1.msra.mxu0 0.0
        %1969 = vmatprep.subr.mxu0 0.0
        %1970 = vmatpush1.msra.mxu0 0.0
        %1971 = vmatprep.subr.mxu0 0.0
        %1972 = vmatpush1.msra.mxu0 0.0
        %1973 = vmatprep.subr.mxu0 0.0
        %1974 = vmatpush1.msra.mxu0 0.0
        %1975 = vmatprep.subr.mxu0 0.0
        %1976 = vmatpush1.msra.mxu0 0.0
        %1977 = vmatprep.subr.mxu0 0.0
        %1978 = vmatpush1.msra.mxu0 0.0
        %1979 = vmatprep.subr.mxu0 0.0
        %1980 = vmatpush1.msra.mxu0 0.0
        %1981 = vmatprep.subr.mxu0 0.0
        %1982 = vmatpush1.msra.mxu0 0.0
        %1983 = vmatprep.subr.mxu0 0.0
        %1984 = vmatpush1.msra.mxu0 0.0
        %1985 = vmatprep.subr.mxu0 0.0
        %1986 = vmatpush1.msra.mxu0 0.0
        %1987 = vmatprep.subr.mxu0 0.0
        %1988 = vmatpush1.msra.mxu0 0.0
        %1989 = vmatprep.subr.mxu0 0.0
        %1990 = vmatpush1.msra.mxu0 0.0
        %1991 = vmatprep.subr.mxu0 0.0
        %1992 = vmatpush1.msra.mxu0 0.0
        %1993 = vmatprep.subr.mxu0 0.0
        %1994 = vmatpush1.msra.mxu0 0.0
        %1995 = vmatprep.subr.mxu0 0.0
        %1996 = vmatpush1.msra.mxu0 0.0
        %1997 = vmatprep.subr.mxu0 0.0
        %v1998 = vand.u32 %v1226, 4294901760
        %v1999 = vsub.f32 %v1226, %v1998
        %v2000 = vand.u32 %v1999, 4294901760
        %v2001 = vsub.f32 %v1999, %v2000
        %v2002 = vand.u32 %v2001, 4294901760
        %2003 = vmatpush1.msra.mxu0 %v2002
        %2004 = vmatprep.subr.mxu0 0.0
        %2005 = vmatpush2.msra.mxu0 0.0
        %2006 = vmatprep.subr.mxu0 0.0
        %2007 = vmatpush2.msra.mxu0 0.0
        %2008 = vmatprep.subr.mxu0 0.0
        %2009 = vmatpush2.msra.mxu0 0.0
        %2010 = vmatprep.subr.mxu0 0.0
        %2011 = vmatpush2.msra.mxu0 0.0
        %2012 = vmatprep.subr.mxu0 0.0
        %2013 = vmatpush2.msra.mxu0 0.0
        %2014 = vmatprep.subr.mxu0 0.0
        %2015 = vmatpush2.msra.mxu0 0.0
        %2016 = vmatprep.subr.mxu0 0.0
        %2017 = vmatpush2.msra.mxu0 0.0
        %2018 = vmatprep.subr.mxu0 0.0
        %2019 = vmatpush2.msra.mxu0 0.0
        %2020 = vmatprep.subr.mxu0 0.0
        %2021 = vmatpush2.msra.mxu0 0.0
        %2022 = vmatprep.subr.mxu0 0.0
        %2023 = vmatpush2.msra.mxu0 0.0
        %2024 = vmatprep.subr.mxu0 0.0
        %2025 = vmatpush2.msra.mxu0 0.0
        %2026 = vmatprep.subr.mxu0 0.0
        %2027 = vmatpush2.msra.mxu0 0.0
        %2028 = vmatprep.subr.mxu0 0.0
        %2029 = vmatpush2.msra.mxu0 0.0
        %2030 = vmatprep.subr.mxu0 0.0
        %2031 = vmatpush2.msra.mxu0 0.0
        %2032 = vmatprep.subr.mxu0 0.0
        %2033 = vmatpush2.msra.mxu0 0.0
        %2034 = vmatprep.subr.mxu0 0.0
        %2035 = vmatpush2.msra.mxu0 0.0
        %2036 = vmatprep.mubr.f32.mxu0 0.0
        %v2037 = vand.u32 %v1889, 4294901760
        %2038 = vmatmul.mubr.f32.gmra.mxu0 %v2037
        %v2039 = vpop.f32.mrf.mxu0
        %v2040 = vadd.f32 %v1964, %v2039
        %v2041 = vpop.f32.mrf.mxu0
        %2042 = vdwg.mxu0
        %2043 = vmatprep.subr.mxu0 0.0
        %2044 = vmatpush1.msra.mxu0 0.0
        %2045 = vmatprep.subr.mxu0 0.0
        %2046 = vmatpush1.msra.mxu0 0.0
        %2047 = vmatprep.subr.mxu0 0.0
        %2048 = vmatpush1.msra.mxu0 0.0
        %2049 = vmatprep.subr.mxu0 0.0
        %2050 = vmatpush1.msra.mxu0 0.0
        %2051 = vmatprep.subr.mxu0 0.0
        %2052 = vmatpush1.msra.mxu0 0.0
        %2053 = vmatprep.subr.mxu0 0.0
        %2054 = vmatpush1.msra.mxu0 0.0
        %2055 = vmatprep.subr.mxu0 0.0
        %2056 = vmatpush1.msra.mxu0 0.0
        %2057 = vmatprep.subr.mxu0 0.0
        %2058 = vmatpush1.msra.mxu0 0.0
        %2059 = vmatprep.subr.mxu0 0.0
        %2060 = vmatpush1.msra.mxu0 0.0
        %2061 = vmatprep.subr.mxu0 0.0
        %2062 = vmatpush1.msra.mxu0 0.0
        %2063 = vmatprep.subr.mxu0 0.0
        %2064 = vmatpush1.msra.mxu0 0.0
        %2065 = vmatprep.subr.mxu0 0.0
        %2066 = vmatpush1.msra.mxu0 0.0
        %2067 = vmatprep.subr.mxu0 0.0
        %2068 = vmatpush1.msra.mxu0 0.0
        %2069 = vmatprep.subr.mxu0 0.0
        %2070 = vmatpush1.msra.mxu0 0.0
        %2071 = vmatprep.subr.mxu0 0.0
        %2072 = vmatpush1.msra.mxu0 0.0
        %2073 = vmatprep.subr.mxu0 0.0
        %v2074 = vand.u32 %v1226, 4294901760
        %v2075 = vsub.f32 %v1226, %v2074
        %2076 = vmatpush1.msra.mxu0 %v2075
        %2077 = vmatprep.subr.mxu0 0.0
        %2078 = vmatpush2.msra.mxu0 0.0
        %2079 = vmatprep.subr.mxu0 0.0
        %2080 = vmatpush2.msra.mxu0 0.0
        %2081 = vmatprep.subr.mxu0 0.0
        %2082 = vmatpush2.msra.mxu0 0.0
        %2083 = vmatprep.subr.mxu0 0.0
        %2084 = vmatpush2.msra.mxu0 0.0
        %2085 = vmatprep.subr.mxu0 0.0
        %2086 = vmatpush2.msra.mxu0 0.0
        %2087 = vmatprep.subr.mxu0 0.0
        %2088 = vmatpush2.msra.mxu0 0.0
        %2089 = vmatprep.subr.mxu0 0.0
        %2090 = vmatpush2.msra.mxu0 0.0
        %2091 = vmatprep.subr.mxu0 0.0
        %2092 = vmatpush2.msra.mxu0 0.0
        %2093 = vmatprep.subr.mxu0 0.0
        %2094 = vmatpush2.msra.mxu0 0.0
        %2095 = vmatprep.subr.mxu0 0.0
        %2096 = vmatpush2.msra.mxu0 0.0
        %2097 = vmatprep.subr.mxu0 0.0
        %2098 = vmatpush2.msra.mxu0 0.0
        %2099 = vmatprep.subr.mxu0 0.0
        %2100 = vmatpush2.msra.mxu0 0.0
        %2101 = vmatprep.subr.mxu0 0.0
        %2102 = vmatpush2.msra.mxu0 0.0
        %2103 = vmatprep.subr.mxu0 0.0
        %2104 = vmatpush2.msra.mxu0 0.0
        %2105 = vmatprep.subr.mxu0 0.0
        %2106 = vmatpush2.msra.mxu0 0.0
        %2107 = vmatprep.subr.mxu0 0.0
        %2108 = vmatpush2.msra.mxu0 0.0
        %2109 = vmatprep.mubr.f32.mxu0 0.0
        %v2110 = vand.u32 %v1889, 4294901760
        %v2111 = vsub.f32 %v1889, %v2110
        %2112 = vmatmul.mubr.f32.gmra.mxu0 %v2111
        %v2113 = vpop.f32.mrf.mxu0
        %v2114 = vadd.f32 %v2040, %v2113
        %v2115 = vpop.f32.mrf.mxu0
        %2116 = vdwg.mxu0
        %2117 = vmatprep.subr.mxu0 0.0
        %2118 = vmatpush1.msra.mxu0 0.0
        %2119 = vmatprep.subr.mxu0 0.0
        %2120 = vmatpush1.msra.mxu0 0.0
        %2121 = vmatprep.subr.mxu0 0.0
        %2122 = vmatpush1.msra.mxu0 0.0
        %2123 = vmatprep.subr.mxu0 0.0
        %2124 = vmatpush1.msra.mxu0 0.0
        %2125 = vmatprep.subr.mxu0 0.0
        %2126 = vmatpush1.msra.mxu0 0.0
        %2127 = vmatprep.subr.mxu0 0.0
        %2128 = vmatpush1.msra.mxu0 0.0
        %2129 = vmatprep.subr.mxu0 0.0
        %2130 = vmatpush1.msra.mxu0 0.0
        %2131 = vmatprep.subr.mxu0 0.0
        %2132 = vmatpush1.msra.mxu0 0.0
        %2133 = vmatprep.subr.mxu0 0.0
        %2134 = vmatpush1.msra.mxu0 0.0
        %2135 = vmatprep.subr.mxu0 0.0
        %2136 = vmatpush1.msra.mxu0 0.0
        %2137 = vmatprep.subr.mxu0 0.0
        %2138 = vmatpush1.msra.mxu0 0.0
        %2139 = vmatprep.subr.mxu0 0.0
        %2140 = vmatpush1.msra.mxu0 0.0
        %2141 = vmatprep.subr.mxu0 0.0
        %2142 = vmatpush1.msra.mxu0 0.0
        %2143 = vmatprep.subr.mxu0 0.0
        %2144 = vmatpush1.msra.mxu0 0.0
        %2145 = vmatprep.subr.mxu0 0.0
        %2146 = vmatpush1.msra.mxu0 0.0
        %2147 = vmatprep.subr.mxu0 0.0
        %v2148 = vand.u32 %v1226, 4294901760
        %2149 = vmatpush1.msra.mxu0 %v2148
        %2150 = vmatprep.subr.mxu0 0.0
        %2151 = vmatpush2.msra.mxu0 0.0
        %2152 = vmatprep.subr.mxu0 0.0
        %2153 = vmatpush2.msra.mxu0 0.0
        %2154 = vmatprep.subr.mxu0 0.0
        %2155 = vmatpush2.msra.mxu0 0.0
        %2156 = vmatprep.subr.mxu0 0.0
        %2157 = vmatpush2.msra.mxu0 0.0
        %2158 = vmatprep.subr.mxu0 0.0
        %2159 = vmatpush2.msra.mxu0 0.0
        %2160 = vmatprep.subr.mxu0 0.0
        %2161 = vmatpush2.msra.mxu0 0.0
        %2162 = vmatprep.subr.mxu0 0.0
        %2163 = vmatpush2.msra.mxu0 0.0
        %2164 = vmatprep.subr.mxu0 0.0
        %2165 = vmatpush2.msra.mxu0 0.0
        %2166 = vmatprep.subr.mxu0 0.0
        %2167 = vmatpush2.msra.mxu0 0.0
        %2168 = vmatprep.subr.mxu0 0.0
        %2169 = vmatpush2.msra.mxu0 0.0
        %2170 = vmatprep.subr.mxu0 0.0
        %2171 = vmatpush2.msra.mxu0 0.0
        %2172 = vmatprep.subr.mxu0 0.0
        %2173 = vmatpush2.msra.mxu0 0.0
        %2174 = vmatprep.subr.mxu0 0.0
        %2175 = vmatpush2.msra.mxu0 0.0
        %2176 = vmatprep.subr.mxu0 0.0
        %2177 = vmatpush2.msra.mxu0 0.0
        %2178 = vmatprep.subr.mxu0 0.0
        %2179 = vmatpush2.msra.mxu0 0.0
        %2180 = vmatprep.subr.mxu0 0.0
        %2181 = vmatpush2.msra.mxu0 0.0
        %2182 = vmatprep.mubr.f32.mxu0 0.0
        %v2183 = vand.u32 %v1889, 4294901760
        %v2184 = vsub.f32 %v1889, %v2183
        %v2185 = vand.u32 %v2184, 4294901760
        %2186 = vmatmul.mubr.f32.gmra.mxu0 %v2185
        %v2187 = vpop.f32.mrf.mxu0
        %v2188 = vadd.f32 %v2114, %v2187
        %v2189 = vpop.f32.mrf.mxu0
        %2190 = vdwg.mxu0
        %2191 = vmatprep.subr.mxu0 0.0
        %2192 = vmatpush1.msra.mxu0 0.0
        %2193 = vmatprep.subr.mxu0 0.0
        %2194 = vmatpush1.msra.mxu0 0.0
        %2195 = vmatprep.subr.mxu0 0.0
        %2196 = vmatpush1.msra.mxu0 0.0
        %2197 = vmatprep.subr.mxu0 0.0
        %2198 = vmatpush1.msra.mxu0 0.0
        %2199 = vmatprep.subr.mxu0 0.0
        %2200 = vmatpush1.msra.mxu0 0.0
        %2201 = vmatprep.subr.mxu0 0.0
        %2202 = vmatpush1.msra.mxu0 0.0
        %2203 = vmatprep.subr.mxu0 0.0
        %2204 = vmatpush1.msra.mxu0 0.0
        %2205 = vmatprep.subr.mxu0 0.0
        %2206 = vmatpush1.msra.mxu0 0.0
        %2207 = vmatprep.subr.mxu0 0.0
        %2208 = vmatpush1.msra.mxu0 0.0
        %2209 = vmatprep.subr.mxu0 0.0
        %2210 = vmatpush1.msra.mxu0 0.0
        %2211 = vmatprep.subr.mxu0 0.0
        %2212 = vmatpush1.msra.mxu0 0.0
        %2213 = vmatprep.subr.mxu0 0.0
        %2214 = vmatpush1.msra.mxu0 0.0
        %2215 = vmatprep.subr.mxu0 0.0
        %2216 = vmatpush1.msra.mxu0 0.0
        %2217 = vmatprep.subr.mxu0 0.0
        %2218 = vmatpush1.msra.mxu0 0.0
        %2219 = vmatprep.subr.mxu0 0.0
        %2220 = vmatpush1.msra.mxu0 0.0
        %2221 = vmatprep.subr.mxu0 0.0
        %v2222 = vand.u32 %v1226, 4294901760
        %v2223 = vsub.f32 %v1226, %v2222
        %v2224 = vand.u32 %v2223, 4294901760
        %2225 = vmatpush1.msra.mxu0 %v2224
        %2226 = vmatprep.subr.mxu0 0.0
        %2227 = vmatpush2.msra.mxu0 0.0
        %2228 = vmatprep.subr.mxu0 0.0
        %2229 = vmatpush2.msra.mxu0 0.0
        %2230 = vmatprep.subr.mxu0 0.0
        %2231 = vmatpush2.msra.mxu0 0.0
        %2232 = vmatprep.subr.mxu0 0.0
        %2233 = vmatpush2.msra.mxu0 0.0
        %2234 = vmatprep.subr.mxu0 0.0
        %2235 = vmatpush2.msra.mxu0 0.0
        %2236 = vmatprep.subr.mxu0 0.0
        %2237 = vmatpush2.msra.mxu0 0.0
        %2238 = vmatprep.subr.mxu0 0.0
        %2239 = vmatpush2.msra.mxu0 0.0
        %2240 = vmatprep.subr.mxu0 0.0
        %2241 = vmatpush2.msra.mxu0 0.0
        %2242 = vmatprep.subr.mxu0 0.0
        %2243 = vmatpush2.msra.mxu0 0.0
        %2244 = vmatprep.subr.mxu0 0.0
        %2245 = vmatpush2.msra.mxu0 0.0
        %2246 = vmatprep.subr.mxu0 0.0
        %2247 = vmatpush2.msra.mxu0 0.0
        %2248 = vmatprep.subr.mxu0 0.0
        %2249 = vmatpush2.msra.mxu0 0.0
        %2250 = vmatprep.subr.mxu0 0.0
        %2251 = vmatpush2.msra.mxu0 0.0
        %2252 = vmatprep.subr.mxu0 0.0
        %2253 = vmatpush2.msra.mxu0 0.0
        %2254 = vmatprep.subr.mxu0 0.0
        %2255 = vmatpush2.msra.mxu0 0.0
        %2256 = vmatprep.subr.mxu0 0.0
        %2257 = vmatpush2.msra.mxu0 0.0
        %2258 = vmatprep.mubr.f32.mxu0 0.0
        %v2259 = vand.u32 %v1889, 4294901760
        %2260 = vmatmul.mubr.f32.gmra.mxu0 %v2259
        %v2261 = vpop.f32.mrf.mxu0
        %v2262 = vadd.f32 %v2188, %v2261
        %v2263 = vpop.f32.mrf.mxu0
        %2264 = vdwg.mxu0
        %2265 = vmatprep.subr.mxu0 0.0
        %2266 = vmatpush1.msra.mxu0 0.0
        %2267 = vmatprep.subr.mxu0 0.0
        %2268 = vmatpush1.msra.mxu0 0.0
        %2269 = vmatprep.subr.mxu0 0.0
        %2270 = vmatpush1.msra.mxu0 0.0
        %2271 = vmatprep.subr.mxu0 0.0
        %2272 = vmatpush1.msra.mxu0 0.0
        %2273 = vmatprep.subr.mxu0 0.0
        %2274 = vmatpush1.msra.mxu0 0.0
        %2275 = vmatprep.subr.mxu0 0.0
        %2276 = vmatpush1.msra.mxu0 0.0
        %2277 = vmatprep.subr.mxu0 0.0
        %2278 = vmatpush1.msra.mxu0 0.0
        %2279 = vmatprep.subr.mxu0 0.0
        %2280 = vmatpush1.msra.mxu0 0.0
        %2281 = vmatprep.subr.mxu0 0.0
        %2282 = vmatpush1.msra.mxu0 0.0
        %2283 = vmatprep.subr.mxu0 0.0
        %2284 = vmatpush1.msra.mxu0 0.0
        %2285 = vmatprep.subr.mxu0 0.0
        %2286 = vmatpush1.msra.mxu0 0.0
        %2287 = vmatprep.subr.mxu0 0.0
        %2288 = vmatpush1.msra.mxu0 0.0
        %2289 = vmatprep.subr.mxu0 0.0
        %2290 = vmatpush1.msra.mxu0 0.0
        %2291 = vmatprep.subr.mxu0 0.0
        %2292 = vmatpush1.msra.mxu0 0.0
        %2293 = vmatprep.subr.mxu0 0.0
        %2294 = vmatpush1.msra.mxu0 0.0
        %2295 = vmatprep.subr.mxu0 0.0
        %v2296 = vand.u32 %v1226, 4294901760
        %2297 = vmatpush1.msra.mxu0 %v2296
        %2298 = vmatprep.subr.mxu0 0.0
        %2299 = vmatpush2.msra.mxu0 0.0
        %2300 = vmatprep.subr.mxu0 0.0
        %2301 = vmatpush2.msra.mxu0 0.0
        %2302 = vmatprep.subr.mxu0 0.0
        %2303 = vmatpush2.msra.mxu0 0.0
        %2304 = vmatprep.subr.mxu0 0.0
        %2305 = vmatpush2.msra.mxu0 0.0
        %2306 = vmatprep.subr.mxu0 0.0
        %2307 = vmatpush2.msra.mxu0 0.0
        %2308 = vmatprep.subr.mxu0 0.0
        %2309 = vmatpush2.msra.mxu0 0.0
        %2310 = vmatprep.subr.mxu0 0.0
        %2311 = vmatpush2.msra.mxu0 0.0
        %2312 = vmatprep.subr.mxu0 0.0
        %2313 = vmatpush2.msra.mxu0 0.0
        %2314 = vmatprep.subr.mxu0 0.0
        %2315 = vmatpush2.msra.mxu0 0.0
        %2316 = vmatprep.subr.mxu0 0.0
        %2317 = vmatpush2.msra.mxu0 0.0
        %2318 = vmatprep.subr.mxu0 0.0
        %2319 = vmatpush2.msra.mxu0 0.0
        %2320 = vmatprep.subr.mxu0 0.0
        %2321 = vmatpush2.msra.mxu0 0.0
        %2322 = vmatprep.subr.mxu0 0.0
        %2323 = vmatpush2.msra.mxu0 0.0
        %2324 = vmatprep.subr.mxu0 0.0
        %2325 = vmatpush2.msra.mxu0 0.0
        %2326 = vmatprep.subr.mxu0 0.0
        %2327 = vmatpush2.msra.mxu0 0.0
        %2328 = vmatprep.subr.mxu0 0.0
        %2329 = vmatpush2.msra.mxu0 0.0
        %2330 = vmatprep.mubr.f32.mxu0 0.0
        %v2331 = vand.u32 %v1889, 4294901760
        %2332 = vmatmul.mubr.f32.gmra.mxu0 %v2331
        %v2333 = vpop.f32.mrf.mxu0
        %v2334 = vadd.f32 %v2262, %v2333
        %v2335 = vpop.f32.mrf.mxu0
        %2336 = vdwg.mxu0
        %v2337 = vxor.u32 %v2334, 2147483648
        %v2338 = vmul.f32 %v2337, 1.442695
        %v2339 = vpow.pop %v2338
        %v2340 = vadd.f32 %v2339, 1.0
        %v2341 = vrcp.pop %v2340
        %v2342 = vmul.f32 1.0, %v2341
        %2343 = vxpose.xlu0.b32.start [1/16] %v2342, 128
        %2344 = vxpose.xlu0.b32.cont [2/16] 0.0, 128
        %2345 = vxpose.xlu0.b32.cont [3/16] 0.0, 128
        %2346 = vxpose.xlu0.b32.cont [4/16] 0.0, 128
        %2347 = vxpose.xlu0.b32.cont [5/16] 0.0, 128
        %2348 = vxpose.xlu0.b32.cont [6/16] 0.0, 128
        %2349 = vxpose.xlu0.b32.cont [7/16] 0.0, 128
        %2350 = vxpose.xlu0.b32.cont [8/16] 0.0, 128
        %2351 = vxpose.xlu0.b32.cont [9/16] 0.0, 128
        %2352 = vxpose.xlu0.b32.cont [10/16] 0.0, 128
        %2353 = vxpose.xlu0.b32.cont [11/16] 0.0, 128
        %2354 = vxpose.xlu0.b32.cont [12/16] 0.0, 128
        %2355 = vxpose.xlu0.b32.cont [13/16] 0.0, 128
        %2356 = vxpose.xlu0.b32.cont [14/16] 0.0, 128
        %2357 = vxpose.xlu0.b32.cont [15/16] 0.0, 128
        %2358 = vxpose.xlu0.b32.end [16/16] 0.0, 128
        %v2359 = vpop.trf.xlu0
        %v2360 = vpop.trf.xlu0
        %v2361 = vpop.trf.xlu0
        %v2362 = vpop.trf.xlu0
        %v2363 = vpop.trf.xlu0
        %v2364 = vpop.trf.xlu0
        %v2365 = vpop.trf.xlu0
        %v2366 = vpop.trf.xlu0
        %v2367 = vpop.trf.xlu0
        %v2368 = vpop.trf.xlu0
        %v2369 = vpop.trf.xlu0
        %v2370 = vpop.trf.xlu0
        %v2371 = vpop.trf.xlu0
        %v2372 = vpop.trf.xlu0
        %v2373 = vpop.trf.xlu0
        %v2374 = vpop.trf.xlu0
        %2376 = vset.pattern.permute.xlu0 0
        %2377 = vperm.xlu0 %2376, %v2359
        %v2378 = vpop.permute.xlu0 %2377
        %2381 = vset.pattern.permute.xlu0 0
        %2382 = vperm.xlu0 %2381, %v2360
        %v2383 = vpop.permute.xlu0 %2382
        %2386 = vset.pattern.permute.xlu0 0
        %2387 = vperm.xlu0 %2386, %v2361
        %v2388 = vpop.permute.xlu0 %2387
        %2391 = vset.pattern.permute.xlu0 0
        %2392 = vperm.xlu0 %2391, %v2362
        %v2393 = vpop.permute.xlu0 %2392
        %2396 = vset.pattern.permute.xlu0 0
        %2397 = vperm.xlu0 %2396, %v2363
        %v2398 = vpop.permute.xlu0 %2397
        %2401 = vset.pattern.permute.xlu0 0
        %2402 = vperm.xlu0 %2401, %v2364
        %v2403 = vpop.permute.xlu0 %2402
        %2406 = vset.pattern.permute.xlu0 0
        %2407 = vperm.xlu0 %2406, %v2365
        %v2408 = vpop.permute.xlu0 %2407
        %2411 = vset.pattern.permute.xlu0 0
        %2412 = vperm.xlu0 %2411, %v2366
        %v2413 = vpop.permute.xlu0 %2412
        %2416 = vset.pattern.permute.xlu0 0
        %2417 = vperm.xlu0 %2416, %v2367
        %v2418 = vpop.permute.xlu0 %2417
        %2421 = vset.pattern.permute.xlu0 0
        %2422 = vperm.xlu0 %2421, %v2368
        %v2423 = vpop.permute.xlu0 %2422
        %2426 = vset.pattern.permute.xlu0 0
        %2427 = vperm.xlu0 %2426, %v2369
        %v2428 = vpop.permute.xlu0 %2427
        %2431 = vset.pattern.permute.xlu0 0
        %2432 = vperm.xlu0 %2431, %v2370
        %v2433 = vpop.permute.xlu0 %2432
        %2436 = vset.pattern.permute.xlu0 0
        %2437 = vperm.xlu0 %2436, %v2371
        %v2438 = vpop.permute.xlu0 %2437
        %2441 = vset.pattern.permute.xlu0 0
        %2442 = vperm.xlu0 %2441, %v2372
        %v2443 = vpop.permute.xlu0 %2442
        %2446 = vset.pattern.permute.xlu0 0
        %2447 = vperm.xlu0 %2446, %v2373
        %v2448 = vpop.permute.xlu0 %2447
        %2451 = vset.pattern.permute.xlu0 0
        %2452 = vperm.xlu0 %2451, %v2374
        %v2453 = vpop.permute.xlu0 %2452
        %v2455 = vmul.f32 %v324, %v2378
        %v2456 = vmul.f32 %v325, %v2378
        %v2457 = vmul.f32 %v326, %v2378
        %v2458 = vmul.f32 %v327, %v2378
        %v2459 = vmul.f32 %v328, %v2378
        %v2460 = vmul.f32 %v329, %v2378
        %v2461 = vmul.f32 %v330, %v2378
        %v2462 = vmul.f32 %v331, %v2378
        %v2463 = vmul.f32 %v332, %v2383
        %v2464 = vmul.f32 %v333, %v2383
        %v2465 = vmul.f32 %v334, %v2383
        %v2466 = vmul.f32 %v335, %v2383
        %v2467 = vmul.f32 %v336, %v2383
        %v2468 = vmul.f32 %v337, %v2383
        %v2469 = vmul.f32 %v338, %v2383
        %v2470 = vmul.f32 %v339, %v2383
        %v2471 = vmul.f32 %v340, %v2388
        %v2472 = vmul.f32 %v341, %v2388
        %v2473 = vmul.f32 %v342, %v2388
        %v2474 = vmul.f32 %v343, %v2388
        %v2475 = vmul.f32 %v344, %v2388
        %v2476 = vmul.f32 %v345, %v2388
        %v2477 = vmul.f32 %v346, %v2388
        %v2478 = vmul.f32 %v347, %v2388
        %v2479 = vmul.f32 %v348, %v2393
        %v2480 = vmul.f32 %v349, %v2393
        %v2481 = vmul.f32 %v350, %v2393
        %v2482 = vmul.f32 %v351, %v2393
        %v2483 = vmul.f32 %v352, %v2393
        %v2484 = vmul.f32 %v353, %v2393
        %v2485 = vmul.f32 %v354, %v2393
        %v2486 = vmul.f32 %v355, %v2393
        %v2487 = vmul.f32 %v356, %v2398
        %v2488 = vmul.f32 %v357, %v2398
        %v2489 = vmul.f32 %v358, %v2398
        %v2490 = vmul.f32 %v359, %v2398
        %v2491 = vmul.f32 %v360, %v2398
        %v2492 = vmul.f32 %v361, %v2398
        %v2493 = vmul.f32 %v362, %v2398
        %v2494 = vmul.f32 %v363, %v2398
        %v2495 = vmul.f32 %v364, %v2403
        %v2496 = vmul.f32 %v365, %v2403
        %v2497 = vmul.f32 %v366, %v2403
        %v2498 = vmul.f32 %v367, %v2403
        %v2499 = vmul.f32 %v368, %v2403
        %v2500 = vmul.f32 %v369, %v2403
        %v2501 = vmul.f32 %v370, %v2403
        %v2502 = vmul.f32 %v371, %v2403
        %v2503 = vmul.f32 %v372, %v2408
        %v2504 = vmul.f32 %v373, %v2408
        %v2505 = vmul.f32 %v374, %v2408
        %v2506 = vmul.f32 %v375, %v2408
        %v2507 = vmul.f32 %v376, %v2408
        %v2508 = vmul.f32 %v377, %v2408
        %v2509 = vmul.f32 %v378, %v2408
        %v2510 = vmul.f32 %v379, %v2408
        %v2511 = vmul.f32 %v380, %v2413
        %v2512 = vmul.f32 %v381, %v2413
        %v2513 = vmul.f32 %v382, %v2413
        %v2514 = vmul.f32 %v383, %v2413
        %v2515 = vmul.f32 %v384, %v2413
        %v2516 = vmul.f32 %v385, %v2413
        %v2517 = vmul.f32 %v386, %v2413
        %v2518 = vmul.f32 %v387, %v2413
        %v2519 = vmul.f32 %v388, %v2418
        %v2520 = vmul.f32 %v389, %v2418
        %v2521 = vmul.f32 %v390, %v2418
        %v2522 = vmul.f32 %v391, %v2418
        %v2523 = vmul.f32 %v392, %v2418
        %v2524 = vmul.f32 %v393, %v2418
        %v2525 = vmul.f32 %v394, %v2418
        %v2526 = vmul.f32 %v395, %v2418
        %v2527 = vmul.f32 %v396, %v2423
        %v2528 = vmul.f32 %v397, %v2423
        %v2529 = vmul.f32 %v398, %v2423
        %v2530 = vmul.f32 %v399, %v2423
        %v2531 = vmul.f32 %v400, %v2423
        %v2532 = vmul.f32 %v401, %v2423
        %v2533 = vmul.f32 %v402, %v2423
        %v2534 = vmul.f32 %v403, %v2423
        %v2535 = vmul.f32 %v404, %v2428
        %v2536 = vmul.f32 %v405, %v2428
        %v2537 = vmul.f32 %v406, %v2428
        %v2538 = vmul.f32 %v407, %v2428
        %v2539 = vmul.f32 %v408, %v2428
        %v2540 = vmul.f32 %v409, %v2428
        %v2541 = vmul.f32 %v410, %v2428
        %v2542 = vmul.f32 %v411, %v2428
        %v2543 = vmul.f32 %v412, %v2433
        %v2544 = vmul.f32 %v413, %v2433
        %v2545 = vmul.f32 %v414, %v2433
        %v2546 = vmul.f32 %v415, %v2433
        %v2547 = vmul.f32 %v416, %v2433
        %v2548 = vmul.f32 %v417, %v2433
        %v2549 = vmul.f32 %v418, %v2433
        %v2550 = vmul.f32 %v419, %v2433
        %v2551 = vmul.f32 %v420, %v2438
        %v2552 = vmul.f32 %v421, %v2438
        %v2553 = vmul.f32 %v422, %v2438
        %v2554 = vmul.f32 %v423, %v2438
        %v2555 = vmul.f32 %v424, %v2438
        %v2556 = vmul.f32 %v425, %v2438
        %v2557 = vmul.f32 %v426, %v2438
        %v2558 = vmul.f32 %v427, %v2438
        %v2559 = vmul.f32 %v428, %v2443
        %v2560 = vmul.f32 %v429, %v2443
        %v2561 = vmul.f32 %v430, %v2443
        %v2562 = vmul.f32 %v431, %v2443
        %v2563 = vmul.f32 %v432, %v2443
        %v2564 = vmul.f32 %v433, %v2443
        %v2565 = vmul.f32 %v434, %v2443
        %v2566 = vmul.f32 %v435, %v2443
        %v2567 = vmul.f32 %v436, %v2448
        %v2568 = vmul.f32 %v437, %v2448
        %v2569 = vmul.f32 %v438, %v2448
        %v2570 = vmul.f32 %v439, %v2448
        %v2571 = vmul.f32 %v440, %v2448
        %v2572 = vmul.f32 %v441, %v2448
        %v2573 = vmul.f32 %v442, %v2448
        %v2574 = vmul.f32 %v443, %v2448
        %v2575 = vmul.f32 %v444, %v2453
        %v2576 = vmul.f32 %v445, %v2453
        %v2577 = vmul.f32 %v446, %v2453
        %v2578 = vmul.f32 %v447, %v2453
        %v2579 = vmul.f32 %v448, %v2453
        %v2580 = vmul.f32 %v449, %v2453
        %v2581 = vmul.f32 %v450, %v2453
        %v2582 = vmul.f32 %v451, %v2453
        %2583 = vst [vmem:[%s323] sm:$0xff] %v2455
        %2584 = vst [vmem:[%s323 + $0x8] sm:$0xff] %v2456
        %2585 = vst [vmem:[%s323 + $0x10] sm:$0xff] %v2457
        %2586 = vst [vmem:[%s323 + $0x18] sm:$0xff] %v2458
        %2587 = vst [vmem:[%s323 + $0x20] sm:$0xff] %v2459
        %2588 = vst [vmem:[%s323 + $0x28] sm:$0xff] %v2460
        %2589 = vst [vmem:[%s323 + $0x30] sm:$0xff] %v2461
        %2590 = vst [vmem:[%s323 + $0x38] sm:$0xff] %v2462
        %2591 = vst [vmem:[%s323 + $0x40] sm:$0xff] %v2463
        %2592 = vst [vmem:[%s323 + $0x48] sm:$0xff] %v2464
        %2593 = vst [vmem:[%s323 + $0x50] sm:$0xff] %v2465
        %2594 = vst [vmem:[%s323 + $0x58] sm:$0xff] %v2466
        %2595 = vst [vmem:[%s323 + $0x60] sm:$0xff] %v2467
        %2596 = vst [vmem:[%s323 + $0x68] sm:$0xff] %v2468
        %2597 = vst [vmem:[%s323 + $0x70] sm:$0xff] %v2469
        %2598 = vst [vmem:[%s323 + $0x78] sm:$0xff] %v2470
        %2599 = vst [vmem:[%s323 + $0x80] sm:$0xff] %v2471
        %2600 = vst [vmem:[%s323 + $0x88] sm:$0xff] %v2472
        %2601 = vst [vmem:[%s323 + $0x90] sm:$0xff] %v2473
        %2602 = vst [vmem:[%s323 + $0x98] sm:$0xff] %v2474
        %2603 = vst [vmem:[%s323 + $0xa0] sm:$0xff] %v2475
        %2604 = vst [vmem:[%s323 + $0xa8] sm:$0xff] %v2476
        %2605 = vst [vmem:[%s323 + $0xb0] sm:$0xff] %v2477
        %2606 = vst [vmem:[%s323 + $0xb8] sm:$0xff] %v2478
        %2607 = vst [vmem:[%s323 + $0xc0] sm:$0xff] %v2479
        %2608 = vst [vmem:[%s323 + $0xc8] sm:$0xff] %v2480
        %2609 = vst [vmem:[%s323 + $0xd0] sm:$0xff] %v2481
        %2610 = vst [vmem:[%s323 + $0xd8] sm:$0xff] %v2482
        %2611 = vst [vmem:[%s323 + $0xe0] sm:$0xff] %v2483
        %2612 = vst [vmem:[%s323 + $0xe8] sm:$0xff] %v2484
        %2613 = vst [vmem:[%s323 + $0xf0] sm:$0xff] %v2485
        %2614 = vst [vmem:[%s323 + $0xf8] sm:$0xff] %v2486
        %2615 = vst [vmem:[%s323 + $0x100] sm:$0xff] %v2487
        %2616 = vst [vmem:[%s323 + $0x108] sm:$0xff] %v2488
        %2617 = vst [vmem:[%s323 + $0x110] sm:$0xff] %v2489
        %2618 = vst [vmem:[%s323 + $0x118] sm:$0xff] %v2490
        %2619 = vst [vmem:[%s323 + $0x120] sm:$0xff] %v2491
        %2620 = vst [vmem:[%s323 + $0x128] sm:$0xff] %v2492
        %2621 = vst [vmem:[%s323 + $0x130] sm:$0xff] %v2493
        %2622 = vst [vmem:[%s323 + $0x138] sm:$0xff] %v2494
        %2623 = vst [vmem:[%s323 + $0x140] sm:$0xff] %v2495
        %2624 = vst [vmem:[%s323 + $0x148] sm:$0xff] %v2496
        %2625 = vst [vmem:[%s323 + $0x150] sm:$0xff] %v2497
        %2626 = vst [vmem:[%s323 + $0x158] sm:$0xff] %v2498
        %2627 = vst [vmem:[%s323 + $0x160] sm:$0xff] %v2499
        %2628 = vst [vmem:[%s323 + $0x168] sm:$0xff] %v2500
        %2629 = vst [vmem:[%s323 + $0x170] sm:$0xff] %v2501
        %2630 = vst [vmem:[%s323 + $0x178] sm:$0xff] %v2502
        %2631 = vst [vmem:[%s323 + $0x180] sm:$0xff] %v2503
        %2632 = vst [vmem:[%s323 + $0x188] sm:$0xff] %v2504
        %2633 = vst [vmem:[%s323 + $0x190] sm:$0xff] %v2505
        %2634 = vst [vmem:[%s323 + $0x198] sm:$0xff] %v2506
        %2635 = vst [vmem:[%s323 + $0x1a0] sm:$0xff] %v2507
        %2636 = vst [vmem:[%s323 + $0x1a8] sm:$0xff] %v2508
        %2637 = vst [vmem:[%s323 + $0x1b0] sm:$0xff] %v2509
        %2638 = vst [vmem:[%s323 + $0x1b8] sm:$0xff] %v2510
        %2639 = vst [vmem:[%s323 + $0x1c0] sm:$0xff] %v2511
        %2640 = vst [vmem:[%s323 + $0x1c8] sm:$0xff] %v2512
        %2641 = vst [vmem:[%s323 + $0x1d0] sm:$0xff] %v2513
        %2642 = vst [vmem:[%s323 + $0x1d8] sm:$0xff] %v2514
        %2643 = vst [vmem:[%s323 + $0x1e0] sm:$0xff] %v2515
        %2644 = vst [vmem:[%s323 + $0x1e8] sm:$0xff] %v2516
        %2645 = vst [vmem:[%s323 + $0x1f0] sm:$0xff] %v2517
        %2646 = vst [vmem:[%s323 + $0x1f8] sm:$0xff] %v2518
        %2647 = vst [vmem:[%s323 + $0x200] sm:$0xff] %v2519
        %2648 = vst [vmem:[%s323 + $0x208] sm:$0xff] %v2520
        %2649 = vst [vmem:[%s323 + $0x210] sm:$0xff] %v2521
        %2650 = vst [vmem:[%s323 + $0x218] sm:$0xff] %v2522
        %2651 = vst [vmem:[%s323 + $0x220] sm:$0xff] %v2523
        %2652 = vst [vmem:[%s323 + $0x228] sm:$0xff] %v2524
        %2653 = vst [vmem:[%s323 + $0x230] sm:$0xff] %v2525
        %2654 = vst [vmem:[%s323 + $0x238] sm:$0xff] %v2526
        %2655 = vst [vmem:[%s323 + $0x240] sm:$0xff] %v2527
        %2656 = vst [vmem:[%s323 + $0x248] sm:$0xff] %v2528
        %2657 = vst [vmem:[%s323 + $0x250] sm:$0xff] %v2529
        %2658 = vst [vmem:[%s323 + $0x258] sm:$0xff] %v2530
        %2659 = vst [vmem:[%s323 + $0x260] sm:$0xff] %v2531
        %2660 = vst [vmem:[%s323 + $0x268] sm:$0xff] %v2532
        %2661 = vst [vmem:[%s323 + $0x270] sm:$0xff] %v2533
        %2662 = vst [vmem:[%s323 + $0x278] sm:$0xff] %v2534
        %2663 = vst [vmem:[%s323 + $0x280] sm:$0xff] %v2535
        %2664 = vst [vmem:[%s323 + $0x288] sm:$0xff] %v2536
        %2665 = vst [vmem:[%s323 + $0x290] sm:$0xff] %v2537
        %2666 = vst [vmem:[%s323 + $0x298] sm:$0xff] %v2538
        %2667 = vst [vmem:[%s323 + $0x2a0] sm:$0xff] %v2539
        %2668 = vst [vmem:[%s323 + $0x2a8] sm:$0xff] %v2540
        %2669 = vst [vmem:[%s323 + $0x2b0] sm:$0xff] %v2541
        %2670 = vst [vmem:[%s323 + $0x2b8] sm:$0xff] %v2542
        %2671 = vst [vmem:[%s323 + $0x2c0] sm:$0xff] %v2543
        %2672 = vst [vmem:[%s323 + $0x2c8] sm:$0xff] %v2544
        %2673 = vst [vmem:[%s323 + $0x2d0] sm:$0xff] %v2545
        %2674 = vst [vmem:[%s323 + $0x2d8] sm:$0xff] %v2546
        %2675 = vst [vmem:[%s323 + $0x2e0] sm:$0xff] %v2547
        %2676 = vst [vmem:[%s323 + $0x2e8] sm:$0xff] %v2548
        %2677 = vst [vmem:[%s323 + $0x2f0] sm:$0xff] %v2549
        %2678 = vst [vmem:[%s323 + $0x2f8] sm:$0xff] %v2550
        %2679 = vst [vmem:[%s323 + $0x300] sm:$0xff] %v2551
        %2680 = vst [vmem:[%s323 + $0x308] sm:$0xff] %v2552
        %2681 = vst [vmem:[%s323 + $0x310] sm:$0xff] %v2553
        %2682 = vst [vmem:[%s323 + $0x318] sm:$0xff] %v2554
        %2683 = vst [vmem:[%s323 + $0x320] sm:$0xff] %v2555
        %2684 = vst [vmem:[%s323 + $0x328] sm:$0xff] %v2556
        %2685 = vst [vmem:[%s323 + $0x330] sm:$0xff] %v2557
        %2686 = vst [vmem:[%s323 + $0x338] sm:$0xff] %v2558
        %2687 = vst [vmem:[%s323 + $0x340] sm:$0xff] %v2559
        %2688 = vst [vmem:[%s323 + $0x348] sm:$0xff] %v2560
        %2689 = vst [vmem:[%s323 + $0x350] sm:$0xff] %v2561
        %2690 = vst [vmem:[%s323 + $0x358] sm:$0xff] %v2562
        %2691 = vst [vmem:[%s323 + $0x360] sm:$0xff] %v2563
        %2692 = vst [vmem:[%s323 + $0x368] sm:$0xff] %v2564
        %2693 = vst [vmem:[%s323 + $0x370] sm:$0xff] %v2565
        %2694 = vst [vmem:[%s323 + $0x378] sm:$0xff] %v2566
        %2695 = vst [vmem:[%s323 + $0x380] sm:$0xff] %v2567
        %2696 = vst [vmem:[%s323 + $0x388] sm:$0xff] %v2568
        %2697 = vst [vmem:[%s323 + $0x390] sm:$0xff] %v2569
        %2698 = vst [vmem:[%s323 + $0x398] sm:$0xff] %v2570
        %2699 = vst [vmem:[%s323 + $0x3a0] sm:$0xff] %v2571
        %2700 = vst [vmem:[%s323 + $0x3a8] sm:$0xff] %v2572
        %2701 = vst [vmem:[%s323 + $0x3b0] sm:$0xff] %v2573
        %2702 = vst [vmem:[%s323 + $0x3b8] sm:$0xff] %v2574
        %2703 = vst [vmem:[%s323 + $0x3c0] sm:$0xff] %v2575
        %2704 = vst [vmem:[%s323 + $0x3c8] sm:$0xff] %v2576
        %2705 = vst [vmem:[%s323 + $0x3d0] sm:$0xff] %v2577
        %2706 = vst [vmem:[%s323 + $0x3d8] sm:$0xff] %v2578
        %2707 = vst [vmem:[%s323 + $0x3e0] sm:$0xff] %v2579
        %2708 = vst [vmem:[%s323 + $0x3e8] sm:$0xff] %v2580
        %2709 = vst [vmem:[%s323 + $0x3f0] sm:$0xff] %v2581
        %2710 = vst [vmem:[%s323 + $0x3f8] sm:$0xff] %v2582
        %s2711 = sand.u32 %s206, 1
        %s2712 = scalar_lea.sflag [#allocation4], %s2711
        %s2713 = sand.u32 %s206, 1
        %s2714 = smul.addr %s2713, 1024
        %s2715 = scalar_lea.vmem [#allocation5], %s2714
        // Predicated region
        $region57: #{tpu_custom_call.1} parent=51 // pred_check
          %p2716 = pneg %p216
        $region58: #{tpu_custom_call.1} parent=51 // pred_check_branch
          %2718 = sbr.rel (%p2716) target = $region60
        $region59: #{tpu_custom_call.1} parent=51 // pred_region
          %s2720 = ssub.s32 16384, 16384
          %2721 = vsyncadd %s2712, %s2720
          %s2722 = smul.addr %s25, 128
          %s2723 = smul.addr %s2722, 128
          %s2724 = scalar_lea.hbm %s8, %s2723
          %s2725 = sshll.u32 %s2715, 4
          %s2726 = int_to_ptr.vmem [resolvable:$true] %s2725
          %2731 = dma.vmem_to_hbm [thread:$0]  %s2726, 16384, %s2724, %s2712, 1024, 1024, 64
        $region60: #{tpu_custom_call.1} parent=51 // pred_fallthru
          _
      $region52: #{tpu_custom_call.1} parent=5 // pred_fallthru
        _
      %p2732 = scmp.le.s32.totalorder 2, %s20
      // Predicated region
      $region61: #{tpu_custom_call.1} parent=5 // pred_check
        %p2733 = pneg %p2732
      $region62: #{tpu_custom_call.1} parent=5 // pred_check_branch
        %2735 = sbr.rel (%p2733) target = $region64
      $region63: #{tpu_custom_call.1} parent=5 // pred_region
        %s2736 = ssub.s32 %s20, 2
        // Predicated region
        $region65: #{tpu_custom_call.1} parent=63 // pred_check
          %p2737 = pneg %p222
        $region66: #{tpu_custom_call.1} parent=63 // pred_check_branch
          %2739 = sbr.rel (%p2737) target = $region68
        $region67: #{tpu_custom_call.1} parent=63 // pred_region
          %s2740 = sand.u32 %s207, 1
          %s2741 = scalar_lea.sflag [#allocation4], %s2740
          %s2742 = sand.u32 %s207, 1
          %s2743 = smul.addr %s2742, 1024
          %s2744 = scalar_lea.vmem [#allocation5], %s2743
          %2745 = dma.done %s2741, 16384
        $region68: #{tpu_custom_call.1} parent=63 // pred_fallthru
          _
      $region64: #{tpu_custom_call.1} parent=5 // pred_fallthru
        _
    $region6: #{tpu_custom_call.1} parent=1 // loop_footer
      %s24 = sadd.s32 1, %s20
    $region7: #{tpu_custom_call.1} parent=1 // loop_footer_branch
      %19 = sbr.rel target = $region3
    $region8: #{tpu_custom_call.1} parent=1 // loop_exit
      _
    %2746 = vsyncpa [#allocation3], 1
    %s2747 = scalar_lea.sflag [#allocation3], 1
    %2748 = vsyncpa %s2747, 1
    %2749 = vsyncpa [#allocation4], 1
    %s2750 = scalar_lea.sflag [#allocation4], 1
    %2751 = vsyncpa %s2750, 1

</llo_original>
